<compile_context>
chip_gen: v6e
topology: v6e:2x2x1
jax: 0.10.0
libtpu: 0.0.40
codegen_flags: <defaults>
</compile_context>

<pallas_src>
import functools
import math
from typing import Any, NamedTuple, Tuple

import jax
import jax.numpy as jnp
from jax import lax
from jax.experimental import pallas as pl
from jax.experimental.pallas import tpu as pltpu

_LANE = 128  # lane width: last dim of every block padded to this


def _round_up(x, m):
    return ((x + m - 1) // m) * m


def _sublane_for(dtype):
    # minimum second-minor tile: 8 rows (f32), 16 (bf16), 32 (int8/fp8)
    return {4: 8, 2: 16, 1: 32}.get(jnp.dtype(dtype).itemsize, 8)


def _is_tpu():
    try:
        return jax.devices()[0].platform == "tpu"
    except Exception:
        return False


def _tpu_budget():
    """(approx physical VMEM bytes per TensorCore, TensorCores sharing a chip)."""
    try:
        kind = (getattr(jax.devices()[0], "device_kind", "") or "").lower()
    except Exception:
        kind = ""
    if "v7" in kind or "tpu7" in kind:
        return 64 << 20, 2          # v7x: 64 MiB VMEM per TC, 2 TCs per chip
    if "v2" in kind or "v3" in kind:
        return 16 << 20, 1
    if "v4" in kind or "v5p" in kind:
        return 128 << 20, 2         # megacore
    return 128 << 20, 1             # v5e / v6e


class PreparedMLP(NamedTuple):
    mode: str                 # "unrolled" | "stacked"
    in_f: int
    out_f: int
    in_p: int
    hid_p: int
    out_p: int
    num_linear: int
    num_mid: int              # number of stacked hidden->hidden layers (stacked mode)
    flops_per_row: int
    compute_dtype: Any
    arrays: Tuple             # padded (and possibly stacked) weights / biases


# ----------------------------- kernels --------------------------------------

def _leaky(y, slope):
    # LeakyReLU with slope <= 1: single VPU max instead of compare+select.
    return jnp.maximum(y, slope * y)


def _mlp_unrolled_kernel(*refs, num_linear, negative_slope):
    """refs: x_ref, (w_ref, b_ref) * num_linear, o_ref.  Feature dims are padded
    to multiples of 128, so padding propagates as exact zeros through every
    layer (0 @ W = 0, bias pad = 0, LeakyReLU(0) = 0)."""
    x_ref, o_ref = refs[0], refs[-1]
    wb = refs[1:-1]
    h = x_ref[...]
    for layer in range(num_linear):                  # static unroll (shallow MLPs)
        w_ref, b_ref = wb[2 * layer], wb[2 * layer + 1]
        y = jnp.dot(h.astype(w_ref.dtype), w_ref[...],
                    preferred_element_type=jnp.float32)      # MXU, f32 accumulate
        y = y + b_ref[...].astype(jnp.float32)               # bias (f32, VPU)
        if layer < num_linear - 1:
            y = _leaky(y, negative_slope)
        h = y                                                # stays f32 between layers
    o_ref[...] = h.astype(o_ref.dtype)


def _mlp_stacked_kernel(x_ref, w0_ref, b0_ref, wst_ref, bst_ref, wl_ref, bl_ref,
                        o_ref, *, num_mid, negative_slope):
    """Deep-MLP variant: identical hidden layers stacked as (L, H, H)/(L, 1, H)
    and iterated with a fori_loop (bounded code size & vreg live ranges)."""
    # first layer: in -> hidden, LeakyReLU
    h = jnp.dot(x_ref[...].astype(w0_ref.dtype), w0_ref[...],
                preferred_element_type=jnp.float32)
    h = _leaky(h + b0_ref[...].astype(jnp.float32), negative_slope)

    # middle hidden -> hidden layers
    def body(l, h):
        y = jnp.dot(h.astype(wst_ref.dtype), wst_ref[l],
                    preferred_element_type=jnp.float32)
        return _leaky(y + bst_ref[l].astype(jnp.float32), negative_slope)

    h = lax.fori_loop(0, num_mid, body, h)

    # final layer: hidden -> out, no activation
    y = jnp.dot(h.astype(wl_ref.dtype), wl_ref[...],
                preferred_element_type=jnp.float32)
    o_ref[...] = (y + bl_ref[...].astype(jnp.float32)).astype(o_ref.dtype)


# --------------------------- host-side helpers -------------------------------

def prepare_mlp_params(params, *, compute_dtype=jnp.float32, stack_hidden=None):
    """Pad params ONCE (lane-dense, multiples of 128) so the per-call forward
    does no HBM round trips outside the fused kernel.  Reuse the result across
    forward calls."""
    num_linear = len(params)
    assert num_linear >= 2, "NLayerLeakyMLP always has >= 2 linear layers"
    compute_dtype = jnp.dtype(compute_dtype)
    in_f = int(params[0][0].shape[0])
    hid = int(params[0][0].shape[1])
    out_f = int(params[-1][0].shape[1])
    num_mid = num_linear - 2
    if stack_hidden is None:
        stack_hidden = num_mid >= 4   # deep MLP -> fori_loop over stacked weights

    in_p = _round_up(in_f, _LANE)
    hid_p = _round_up(hid, _LANE)
    out_p = _round_up(out_f, _LANE)

    def pad_w(w):
        di, do = w.shape
        dip, dop = _round_up(di, _LANE), _round_up(do, _LANE)
        if (dip, dop) == (di, do) and w.dtype == compute_dtype:
            return jnp.asarray(w)
        return jnp.zeros((dip, dop), compute_dtype).at[:di, :do].set(
            w.astype(compute_dtype))

    def pad_b(b):
        do = b.shape[0]
        dop = _round_up(do, _LANE)
        return jnp.zeros((1, dop), jnp.float32).at[0, :do].set(
            b.astype(jnp.float32))

    flops_per_row = 2 * sum(
        _round_up(w.shape[0], _LANE) * _round_up(w.shape[1], _LANE)
        for (w, _) in params)

    if stack_hidden and num_mid >= 1:
        (w0, b0), (wl, bl) = params[0], params[-1]
        mids = params[1:-1]
        wst = jnp.stack([pad_w(w) for (w, _) in mids], axis=0)   # (L, hid_p, hid_p)
        bst = jnp.stack([pad_b(b) for (_, b) in mids], axis=0)   # (L, 1, hid_p)
        arrays = (pad_w(w0), pad_b(b0), wst, bst, pad_w(wl), pad_b(bl))
        mode = "stacked"
    else:
        arrs = []
        for (w, b) in params:
            arrs.append(pad_w(w))
            arrs.append(pad_b(b))
        arrays = tuple(arrs)
        mode = "unrolled"
        num_mid = 0

    return PreparedMLP(mode, in_f, out_f, in_p, hid_p, out_p,
                       num_linear, num_mid, flops_per_row, compute_dtype, arrays)


def _choose_tile_b(batch, sublane, requested, avail_bytes, per_row_bytes, num_tc):
    if requested is None:
        tile_b = 256 if num_tc >= 2 else 512   # amortize per-step overhead / MXU push
    else:
        tile_b = int(requested)
    tile_b = min(tile_b, _round_up(batch, sublane))
    if per_row_bytes > 0:
        fit = (max(avail_bytes, 0) // per_row_bytes) // sublane * sublane
        if fit >= sublane:
            tile_b = min(tile_b, fit)
    tile_b = max(sublane, (tile_b // sublane) * sublane)
    if num_tc >= 2 and batch > sublane:
        # ensure >= 2 grid steps so both TensorCores get work (v7x / megacore)
        while tile_b >= 2 * sublane and _round_up(batch, tile_b) // tile_b < 2:
            tile_b = max(sublane, _round_up(tile_b // 2, sublane))
    return tile_b


def nlayer_leaky_mlp_forward(params, x, *, tile_b=None, compute_dtype=None,
                             negative_slope=0.2, prepared=None):
    """Forward pass matching NLayerLeakyMLP via one fused Pallas kernel.

    Pass `prepared=prepare_mlp_params(params, ...)` to amortize the one-time
    padding across calls.  compute_dtype defaults to bf16 MXU operands on TPU
    (accumulation, bias add and LeakyReLU stay f32); pass jnp.float32 for an
    exact-f32 path."""
    batch, in_f = x.shape
    out_dtype = x.dtype
    vmem_phys, num_tc = _tpu_budget()

    if prepared is None:
        cd = compute_dtype
        if cd is None:
            cd = jnp.bfloat16 if _is_tpu() else x.dtype
        prepared = prepare_mlp_params(params, compute_dtype=cd)
        wbytes = sum(int(a.nbytes) for a in prepared.arrays)
        if jnp.dtype(cd).itemsize == 4 and wbytes > int(0.6 * vmem_phys):
            # resident f32 weights do not fit (e.g. v7x 64 MiB): keep them as bf16
            prepared = prepare_mlp_params(params, compute_dtype=jnp.bfloat16)
        # TODO(synk): if even bf16 weights exceed ~60% of VMEM, stream the stacked
        # hidden weights from HBM (memory_space=pl.ANY + pltpu.emit_pipeline)
        # instead of keeping them VMEM-resident.

    assert in_f == prepared.in_f, "x feature dim does not match params"
    comp_dtype = prepared.compute_dtype
    comp_isz = jnp.dtype(comp_dtype).itemsize
    out_isz = jnp.dtype(out_dtype).itemsize
    sublane = _sublane_for(comp_dtype)
    in_p, hid_p, out_p = prepared.in_p, prepared.hid_p, prepared.out_p
    out_f = prepared.out_f

    use_buffered = hasattr(pl, "Buffered")
    weight_bytes = sum(int(a.nbytes) for a in prepared.arrays)
    wbuf_factor = 1 if use_buffered else 2

    # batch tiling: large tiles, multiple of the dtype sublane minimum, clamped
    # so resident weights + double-buffered I/O tiles + f32 activations fit VMEM
    per_row = (2 * in_p * comp_isz + 2 * out_p * out_isz
               + 4 * max(in_p, hid_p, out_p) * 4)
    avail = int(0.7 * vmem_phys) - weight_bytes * wbuf_factor
    tile_b = _choose_tile_b(batch, sublane, tile_b, avail, per_row, num_tc)
    batch_p = _round_up(batch, tile_b)

    # pad the input only when needed (skip entirely if already dense)
    if x.shape == (batch_p, in_p) and x.dtype == comp_dtype:
        x_p = x
    else:
        x_p = jnp.zeros((batch_p, in_p), comp_dtype).at[:batch, :in_f].set(
            x.astype(comp_dtype))

    grid = (batch_p // tile_b,)

    # explicit scoped-VMEM limit (defaults are far below physical capacity);
    # only set it when the default (~16 MiB) would actually be too small
    need = int(1.25 * (weight_bytes * wbuf_factor
                       + 2 * tile_b * in_p * comp_isz
                       + 2 * tile_b * out_p * out_isz
                       + 4 * tile_b * max(in_p, hid_p, out_p) * 4)) + (1 << 20)
    vmem_limit = None if need <= (16 << 20) else int(min(need, int(0.9 * vmem_phys)))

    flops = prepared.flops_per_row * batch_p
    bytes_accessed = int(x_p.nbytes) + weight_bytes + batch_p * out_p * out_isz

    if prepared.mode == "stacked":
        kernel = functools.partial(_mlp_stacked_kernel,
                                   num_mid=prepared.num_mid,
                                   negative_slope=negative_slope)
    else:
        kernel = functools.partial(_mlp_unrolled_kernel,
                                   num_linear=prepared.num_linear,
                                   negative_slope=negative_slope)

    def resident_spec(shape, buffered):
        nd = len(shape)
        imap = lambda i: (0,) * nd   # grid-invariant -> fetched once, VMEM-resident
        if buffered:
            # no re-DMA across the grid, so single-buffer it (halves weight VMEM)
            return pl.BlockSpec(shape, imap, pipeline_mode=pl.Buffered(1))
        return pl.BlockSpec(shape, imap)

    def call(buffered):
        in_specs = [pl.BlockSpec((tile_b, in_p), lambda i: (i, 0))]
        in_specs += [resident_spec(a.shape, buffered) for a in prepared.arrays]
        out_specs = pl.BlockSpec((tile_b, out_p), lambda i: (i, 0))
        return pl.pallas_call(
            kernel,
            out_shape=jax.ShapeDtypeStruct((batch_p, out_p), out_dtype),
            grid_spec=pltpu.PrefetchScalarGridSpec(
                num_scalar_prefetch=0, grid=grid,
                in_specs=in_specs, out_specs=out_specs),
            compiler_params=pltpu.CompilerParams(
                dimension_semantics=("parallel",),
                vmem_limit_bytes=vmem_limit),
            cost_estimate=pl.CostEstimate(flops=flops, transcendentals=0,
                                          bytes_accessed=bytes_accessed),
        )(x_p, *prepared.arrays)

    try:
        y_p = call(use_buffered)
    except Exception:
        if not use_buffered:
            raise
        y_p = call(False)   # fall back to default double-buffering if Buffered(1) rejected

    if (batch_p, out_p) == (batch, out_f):
        return y_p
    return y_p[:batch, :out_f]


# ------------------------------ demo / checks --------------------------------

def init_nlayer_leaky_mlp_params(key, in_features, out_features, num_layers,
                                 hidden_dim=64, dtype=jnp.float32):
    """Init mirroring torch.nn.Linear default:
    weight, bias ~ U(-1/sqrt(fan_in), 1/sqrt(fan_in)); stored (fan_in, fan_out)."""
    dims = []
    for l in range(num_layers):
        dims.append((in_features, hidden_dim) if l == 0 else (hidden_dim, hidden_dim))
    dims.append((hidden_dim, out_features))

    params = []
    for (fan_in, fan_out) in dims:
        key, kw, kb = jax.random.split(key, 3)
        bound = 1.0 / math.sqrt(fan_in)
        w = jax.random.uniform(kw, (fan_in, fan_out), dtype=dtype,
                               minval=-bound, maxval=bound)
        b = jax.random.uniform(kb, (fan_out,), dtype=dtype,
                               minval=-bound, maxval=bound)
        params.append((w, b))
    return params


def _reference_forward(params, x, negative_slope=0.2):
    h = x
    n = len(params)
    for i, (w, b) in enumerate(params):
        h = h @ w + b
        if i < n - 1:
            h = jnp.where(h >= 0.0, h, negative_slope * h)
    return h


if __name__ == "__main__":
    # --- Config A: small shape consistent with the module (unrolled path) ---
    batch, in_features, out_features, hidden_dim, num_layers = 8, 16, 8, 32, 3
    key = jax.random.PRNGKey(0)
    key_params, key_x = jax.random.split(key)
    params = init_nlayer_leaky_mlp_params(
        key_params, in_features, out_features, num_layers, hidden_dim)
    x = jax.random.normal(key_x, (batch, in_features), dtype=jnp.float32)
    y_ref = _reference_forward(params, x)

    # f32 MXU operands via pre-padded params: tight match with the reference.
    prep_f32 = prepare_mlp_params(params, compute_dtype=jnp.float32)
    y_f32 = jax.block_until_ready(
        nlayer_leaky_mlp_forward(params, x, prepared=prep_f32))
    assert y_f32.shape == (batch, out_features)
    assert jnp.allclose(y_f32, y_ref, atol=1e-5, rtol=1e-5), "f32 mismatch vs reference"

    # Default fast path (bf16 MXU operands on TPU, f32 accumulation): loose tolerance.
    y_fast = jax.block_until_ready(nlayer_leaky_mlp_forward(params, x))
    assert y_fast.shape == (batch, out_features)
    assert jnp.allclose(y_fast, y_ref, atol=1e-1, rtol=1e-1), "bf16 mismatch vs reference"

    # --- Config B: deeper MLP -> stacked-hidden fori_loop path ---
    batch_b, num_layers_b = 32, 6
    kp2, kx2 = jax.random.split(jax.random.PRNGKey(1))
    params_b = init_nlayer_leaky_mlp_params(
        kp2, in_features, out_features, num_layers_b, hidden_dim)
    x_b = jax.random.normal(kx2, (batch_b, in_features), dtype=jnp.float32)
    prep_b = prepare_mlp_params(params_b, compute_dtype=jnp.float32)
    assert prep_b.mode == "stacked"
    y_b = jax.block_until_ready(
        nlayer_leaky_mlp_forward(params_b, x_b, prepared=prep_b))
    y_b_ref = _reference_forward(params_b, x_b)
    assert y_b.shape == (batch_b, out_features)
    assert jnp.allclose(y_b, y_b_ref, atol=1e-4, rtol=1e-4), "deep f32 mismatch"

    print("KERNEL_OK")
</pallas_src>

<mosaic_0001>
module attributes {stable_mosaic.version = 11 : i64} {
  func.func @_mlp_unrolled_kernel(%arg0: i32, %arg1: memref<8x128xf32, #tpu.memory_space<vmem>>, %arg2: memref<128x128xf32, #tpu.memory_space<vmem>>, %arg3: memref<1x128xf32, #tpu.memory_space<vmem>>, %arg4: memref<128x128xf32, #tpu.memory_space<vmem>>, %arg5: memref<1x128xf32, #tpu.memory_space<vmem>>, %arg6: memref<128x128xf32, #tpu.memory_space<vmem>>, %arg7: memref<1x128xf32, #tpu.memory_space<vmem>>, %arg8: memref<128x128xf32, #tpu.memory_space<vmem>>, %arg9: memref<1x128xf32, #tpu.memory_space<vmem>>, %arg10: memref<8x128xf32, #tpu.memory_space<vmem>>) attributes {dimension_semantics = [#tpu.dimension_semantics<parallel>], iteration_bounds = array<i64: 1>, scalar_prefetch = 0 : i64, scratch_operands = 0 : i64, tpu.core_type = #tpu.core_type<tc>, window_params = [{transform_indices = @transform_0, window_bounds = array<i64: 8, 128>}, {pipeline_mode = #tpu.pipeline_mode<synchronous>, transform_indices = @transform_1, window_bounds = array<i64: 128, 128>}, {pipeline_mode = #tpu.pipeline_mode<synchronous>, transform_indices = @transform_2, window_bounds = array<i64: 1, 128>}, {pipeline_mode = #tpu.pipeline_mode<synchronous>, transform_indices = @transform_3, window_bounds = array<i64: 128, 128>}, {pipeline_mode = #tpu.pipeline_mode<synchronous>, transform_indices = @transform_4, window_bounds = array<i64: 1, 128>}, {pipeline_mode = #tpu.pipeline_mode<synchronous>, transform_indices = @transform_5, window_bounds = array<i64: 128, 128>}, {pipeline_mode = #tpu.pipeline_mode<synchronous>, transform_indices = @transform_6, window_bounds = array<i64: 1, 128>}, {pipeline_mode = #tpu.pipeline_mode<synchronous>, transform_indices = @transform_7, window_bounds = array<i64: 128, 128>}, {pipeline_mode = #tpu.pipeline_mode<synchronous>, transform_indices = @transform_8, window_bounds = array<i64: 1, 128>}, {transform_indices = @transform_9, window_bounds = array<i64: 8, 128>}]} {
    %c0 = arith.constant 0 : index
    %c0_0 = arith.constant 0 : index
    %0 = vector.load %arg1[%c0, %c0_0] : memref<8x128xf32, #tpu.memory_space<vmem>>, vector<8x128xf32>
    %c0_1 = arith.constant 0 : index
    %c0_2 = arith.constant 0 : index
    %1 = vector.load %arg2[%c0_1, %c0_2] : memref<128x128xf32, #tpu.memory_space<vmem>>, vector<128x128xf32>
    %cst = arith.constant dense<0.000000e+00> : vector<8x128xf32>
    %2 = tpu.matmul %0, %1, %cst {dimension_numbers = #tpu.dot_dimension_numbers<[1], [0], [0], [1], [0, 0, 1, 1], [], []>} : vector<8x128xf32>, vector<128x128xf32>, vector<8x128xf32> -> vector<8x128xf32>
    %c0_3 = arith.constant 0 : index
    %c0_4 = arith.constant 0 : index
    %3 = vector.load %arg3[%c0_3, %c0_4] : memref<1x128xf32, #tpu.memory_space<vmem>>, vector<1x128xf32>
    %4 = vector.broadcast %3 : vector<1x128xf32> to vector<8x128xf32>
    %5 = arith.addf %2, %4 : vector<8x128xf32>
    %cst_5 = arith.constant 2.000000e-01 : f32
    %6 = vector.broadcast %cst_5 : f32 to vector<8x128xf32>
    %7 = arith.mulf %6, %5 : vector<8x128xf32>
    %8 = arith.maximumf %5, %7 : vector<8x128xf32>
    %c0_6 = arith.constant 0 : index
    %c0_7 = arith.constant 0 : index
    %9 = vector.load %arg4[%c0_6, %c0_7] : memref<128x128xf32, #tpu.memory_space<vmem>>, vector<128x128xf32>
    %cst_8 = arith.constant dense<0.000000e+00> : vector<8x128xf32>
    %10 = tpu.matmul %8, %9, %cst_8 {dimension_numbers = #tpu.dot_dimension_numbers<[1], [0], [0], [1], [0, 0, 1, 1], [], []>} : vector<8x128xf32>, vector<128x128xf32>, vector<8x128xf32> -> vector<8x128xf32>
    %c0_9 = arith.constant 0 : index
    %c0_10 = arith.constant 0 : index
    %11 = vector.load %arg5[%c0_9, %c0_10] : memref<1x128xf32, #tpu.memory_space<vmem>>, vector<1x128xf32>
    %12 = vector.broadcast %11 : vector<1x128xf32> to vector<8x128xf32>
    %13 = arith.addf %10, %12 : vector<8x128xf32>
    %cst_11 = arith.constant 2.000000e-01 : f32
    %14 = vector.broadcast %cst_11 : f32 to vector<8x128xf32>
    %15 = arith.mulf %14, %13 : vector<8x128xf32>
    %16 = arith.maximumf %13, %15 : vector<8x128xf32>
    %c0_12 = arith.constant 0 : index
    %c0_13 = arith.constant 0 : index
    %17 = vector.load %arg6[%c0_12, %c0_13] : memref<128x128xf32, #tpu.memory_space<vmem>>, vector<128x128xf32>
    %cst_14 = arith.constant dense<0.000000e+00> : vector<8x128xf32>
    %18 = tpu.matmul %16, %17, %cst_14 {dimension_numbers = #tpu.dot_dimension_numbers<[1], [0], [0], [1], [0, 0, 1, 1], [], []>} : vector<8x128xf32>, vector<128x128xf32>, vector<8x128xf32> -> vector<8x128xf32>
    %c0_15 = arith.constant 0 : index
    %c0_16 = arith.constant 0 : index
    %19 = vector.load %arg7[%c0_15, %c0_16] : memref<1x128xf32, #tpu.memory_space<vmem>>, vector<1x128xf32>
    %20 = vector.broadcast %19 : vector<1x128xf32> to vector<8x128xf32>
    %21 = arith.addf %18, %20 : vector<8x128xf32>
    %cst_17 = arith.constant 2.000000e-01 : f32
    %22 = vector.broadcast %cst_17 : f32 to vector<8x128xf32>
    %23 = arith.mulf %22, %21 : vector<8x128xf32>
    %24 = arith.maximumf %21, %23 : vector<8x128xf32>
    %c0_18 = arith.constant 0 : index
    %c0_19 = arith.constant 0 : index
    %25 = vector.load %arg8[%c0_18, %c0_19] : memref<128x128xf32, #tpu.memory_space<vmem>>, vector<128x128xf32>
    %cst_20 = arith.constant dense<0.000000e+00> : vector<8x128xf32>
    %26 = tpu.matmul %24, %25, %cst_20 {dimension_numbers = #tpu.dot_dimension_numbers<[1], [0], [0], [1], [0, 0, 1, 1], [], []>} : vector<8x128xf32>, vector<128x128xf32>, vector<8x128xf32> -> vector<8x128xf32>
    %c0_21 = arith.constant 0 : index
    %c0_22 = arith.constant 0 : index
    %27 = vector.load %arg9[%c0_21, %c0_22] : memref<1x128xf32, #tpu.memory_space<vmem>>, vector<1x128xf32>
    %28 = vector.broadcast %27 : vector<1x128xf32> to vector<8x128xf32>
    %29 = arith.addf %26, %28 : vector<8x128xf32>
    %c0_23 = arith.constant 0 : index
    %c0_24 = arith.constant 0 : index
    %30 = vector.load %arg10[%c0_23, %c0_24] : memref<8x128xf32, #tpu.memory_space<vmem>>, vector<8x128xf32>
    tpu.vector_store %arg10[%c0_23, %c0_24], %29 {strides = array<i32>} : memref<8x128xf32, #tpu.memory_space<vmem>>, vector<8x128xf32>,
    return
  }
  func.func @transform_0(%arg0: i32) -> (i32, i32) {
    %c0_i32 = arith.constant 0 : i32
    %c0_i32_0 = arith.constant 0 : i32
    return %arg0, %c0_i32 : i32, i32
  }
  func.func @transform_1(%arg0: i32) -> (i32, i32) {
    %c0_i32 = arith.constant 0 : i32
    %c0_i32_0 = arith.constant 0 : i32
    %c0_i32_1 = arith.constant 0 : i32
    return %c0_i32, %c0_i32_0 : i32, i32
  }
  func.func @transform_2(%arg0: i32) -> (i32, i32) {
    %c0_i32 = arith.constant 0 : i32
    %c0_i32_0 = arith.constant 0 : i32
    %c0_i32_1 = arith.constant 0 : i32
    return %c0_i32, %c0_i32_0 : i32, i32
  }
  func.func @transform_3(%arg0: i32) -> (i32, i32) {
    %c0_i32 = arith.constant 0 : i32
    %c0_i32_0 = arith.constant 0 : i32
    %c0_i32_1 = arith.constant 0 : i32
    return %c0_i32, %c0_i32_0 : i32, i32
  }
  func.func @transform_4(%arg0: i32) -> (i32, i32) {
    %c0_i32 = arith.constant 0 : i32
    %c0_i32_0 = arith.constant 0 : i32
    %c0_i32_1 = arith.constant 0 : i32
    return %c0_i32, %c0_i32_0 : i32, i32
  }
  func.func @transform_5(%arg0: i32) -> (i32, i32) {
    %c0_i32 = arith.constant 0 : i32
    %c0_i32_0 = arith.constant 0 : i32
    %c0_i32_1 = arith.constant 0 : i32
    return %c0_i32, %c0_i32_0 : i32, i32
  }
  func.func @transform_6(%arg0: i32) -> (i32, i32) {
    %c0_i32 = arith.constant 0 : i32
    %c0_i32_0 = arith.constant 0 : i32
    %c0_i32_1 = arith.constant 0 : i32
    return %c0_i32, %c0_i32_0 : i32, i32
  }
  func.func @transform_7(%arg0: i32) -> (i32, i32) {
    %c0_i32 = arith.constant 0 : i32
    %c0_i32_0 = arith.constant 0 : i32
    %c0_i32_1 = arith.constant 0 : i32
    return %c0_i32, %c0_i32_0 : i32, i32
  }
  func.func @transform_8(%arg0: i32) -> (i32, i32) {
    %c0_i32 = arith.constant 0 : i32
    %c0_i32_0 = arith.constant 0 : i32
    %c0_i32_1 = arith.constant 0 : i32
    return %c0_i32, %c0_i32_0 : i32, i32
  }
  func.func @transform_9(%arg0: i32) -> (i32, i32) {
    %c0_i32 = arith.constant 0 : i32
    %c0_i32_0 = arith.constant 0 : i32
    return %arg0, %c0_i32 : i32, i32
  }
}

module attributes {stable_mosaic.version = 11 : i64} {
  func.func @_mlp_unrolled_kernel(%arg0: i32, %arg1: memref<8x128xf32, #tpu.memory_space<vmem>>, %arg2: memref<128x128xf32, #tpu.memory_space<vmem>>, %arg3: memref<1x128xf32, #tpu.memory_space<vmem>>, %arg4: memref<128x128xf32, #tpu.memory_space<vmem>>, %arg5: memref<1x128xf32, #tpu.memory_space<vmem>>, %arg6: memref<128x128xf32, #tpu.memory_space<vmem>>, %arg7: memref<1x128xf32, #tpu.memory_space<vmem>>, %arg8: memref<128x128xf32, #tpu.memory_space<vmem>>, %arg9: memref<1x128xf32, #tpu.memory_space<vmem>>, %arg10: memref<8x128xf32, #tpu.memory_space<vmem>>) attributes {dimension_semantics = [#tpu.dimension_semantics<parallel>], iteration_bounds = array<i64: 1>, scalar_prefetch = 0 : i64, scratch_operands = 0 : i64, tpu.core_type = #tpu.core_type<tc>, window_params = [{transform_indices = @transform_0, window_bounds = array<i64: 8, 128>}, {pipeline_mode = #tpu.pipeline_mode<synchronous>, transform_indices = @transform_1, window_bounds = array<i64: 128, 128>}, {pipeline_mode = #tpu.pipeline_mode<synchronous>, transform_indices = @transform_2, window_bounds = array<i64: 1, 128>}, {pipeline_mode = #tpu.pipeline_mode<synchronous>, transform_indices = @transform_3, window_bounds = array<i64: 128, 128>}, {pipeline_mode = #tpu.pipeline_mode<synchronous>, transform_indices = @transform_4, window_bounds = array<i64: 1, 128>}, {pipeline_mode = #tpu.pipeline_mode<synchronous>, transform_indices = @transform_5, window_bounds = array<i64: 128, 128>}, {pipeline_mode = #tpu.pipeline_mode<synchronous>, transform_indices = @transform_6, window_bounds = array<i64: 1, 128>}, {pipeline_mode = #tpu.pipeline_mode<synchronous>, transform_indices = @transform_7, window_bounds = array<i64: 128, 128>}, {pipeline_mode = #tpu.pipeline_mode<synchronous>, transform_indices = @transform_8, window_bounds = array<i64: 1, 128>}, {transform_indices = @transform_9, window_bounds = array<i64: 8, 128>}]} {
    %c0 = arith.constant 0 : index
    %c0_0 = arith.constant 0 : index
    %0 = vector.load %arg1[%c0, %c0_0] : memref<8x128xf32, #tpu.memory_space<vmem>>, vector<8x128xf32>
    %c0_1 = arith.constant 0 : index
    %c0_2 = arith.constant 0 : index
    %1 = vector.load %arg2[%c0_1, %c0_2] : memref<128x128xf32, #tpu.memory_space<vmem>>, vector<128x128xf32>
    %cst = arith.constant dense<0.000000e+00> : vector<8x128xf32>
    %2 = tpu.matmul %0, %1, %cst {dimension_numbers = #tpu.dot_dimension_numbers<[1], [0], [0], [1], [0, 0, 1, 1], [], []>} : vector<8x128xf32>, vector<128x128xf32>, vector<8x128xf32> -> vector<8x128xf32>
    %c0_3 = arith.constant 0 : index
    %c0_4 = arith.constant 0 : index
    %3 = vector.load %arg3[%c0_3, %c0_4] : memref<1x128xf32, #tpu.memory_space<vmem>>, vector<1x128xf32>
    %4 = vector.broadcast %3 : vector<1x128xf32> to vector<8x128xf32>
    %5 = arith.addf %2, %4 : vector<8x128xf32>
    %cst_5 = arith.constant 2.000000e-01 : f32
    %6 = vector.broadcast %cst_5 : f32 to vector<8x128xf32>
    %7 = arith.mulf %6, %5 : vector<8x128xf32>
    %8 = arith.maximumf %5, %7 : vector<8x128xf32>
    %c0_6 = arith.constant 0 : index
    %c0_7 = arith.constant 0 : index
    %9 = vector.load %arg4[%c0_6, %c0_7] : memref<128x128xf32, #tpu.memory_space<vmem>>, vector<128x128xf32>
    %cst_8 = arith.constant dense<0.000000e+00> : vector<8x128xf32>
    %10 = tpu.matmul %8, %9, %cst_8 {dimension_numbers = #tpu.dot_dimension_numbers<[1], [0], [0], [1], [0, 0, 1, 1], [], []>} : vector<8x128xf32>, vector<128x128xf32>, vector<8x128xf32> -> vector<8x128xf32>
    %c0_9 = arith.constant 0 : index
    %c0_10 = arith.constant 0 : index
    %11 = vector.load %arg5[%c0_9, %c0_10] : memref<1x128xf32, #tpu.memory_space<vmem>>, vector<1x128xf32>
    %12 = vector.broadcast %11 : vector<1x128xf32> to vector<8x128xf32>
    %13 = arith.addf %10, %12 : vector<8x128xf32>
    %cst_11 = arith.constant 2.000000e-01 : f32
    %14 = vector.broadcast %cst_11 : f32 to vector<8x128xf32>
    %15 = arith.mulf %14, %13 : vector<8x128xf32>
    %16 = arith.maximumf %13, %15 : vector<8x128xf32>
    %c0_12 = arith.constant 0 : index
    %c0_13 = arith.constant 0 : index
    %17 = vector.load %arg6[%c0_12, %c0_13] : memref<128x128xf32, #tpu.memory_space<vmem>>, vector<128x128xf32>
    %cst_14 = arith.constant dense<0.000000e+00> : vector<8x128xf32>
    %18 = tpu.matmul %16, %17, %cst_14 {dimension_numbers = #tpu.dot_dimension_numbers<[1], [0], [0], [1], [0, 0, 1, 1], [], []>} : vector<8x128xf32>, vector<128x128xf32>, vector<8x128xf32> -> vector<8x128xf32>
    %c0_15 = arith.constant 0 : index
    %c0_16 = arith.constant 0 : index
    %19 = vector.load %arg7[%c0_15, %c0_16] : memref<1x128xf32, #tpu.memory_space<vmem>>, vector<1x128xf32>
    %20 = vector.broadcast %19 : vector<1x128xf32> to vector<8x128xf32>
    %21 = arith.addf %18, %20 : vector<8x128xf32>
    %cst_17 = arith.constant 2.000000e-01 : f32
    %22 = vector.broadcast %cst_17 : f32 to vector<8x128xf32>
    %23 = arith.mulf %22, %21 : vector<8x128xf32>
    %24 = arith.maximumf %21, %23 : vector<8x128xf32>
    %c0_18 = arith.constant 0 : index
    %c0_19 = arith.constant 0 : index
    %25 = vector.load %arg8[%c0_18, %c0_19] : memref<128x128xf32, #tpu.memory_space<vmem>>, vector<128x128xf32>
    %cst_20 = arith.constant dense<0.000000e+00> : vector<8x128xf32>
    %26 = tpu.matmul %24, %25, %cst_20 {dimension_numbers = #tpu.dot_dimension_numbers<[1], [0], [0], [1], [0, 0, 1, 1], [], []>} : vector<8x128xf32>, vector<128x128xf32>, vector<8x128xf32> -> vector<8x128xf32>
    %c0_21 = arith.constant 0 : index
    %c0_22 = arith.constant 0 : index
    %27 = vector.load %arg9[%c0_21, %c0_22] : memref<1x128xf32, #tpu.memory_space<vmem>>, vector<1x128xf32>
    %28 = vector.broadcast %27 : vector<1x128xf32> to vector<8x128xf32>
    %29 = arith.addf %26, %28 : vector<8x128xf32>
    %c0_23 = arith.constant 0 : index
    %c0_24 = arith.constant 0 : index
    %30 = vector.load %arg10[%c0_23, %c0_24] : memref<8x128xf32, #tpu.memory_space<vmem>>, vector<8x128xf32>
    tpu.vector_store %arg10[%c0_23, %c0_24], %29 {strides = array<i32>} : memref<8x128xf32, #tpu.memory_space<vmem>>, vector<8x128xf32>,
    return
  }
  func.func @transform_0(%arg0: i32) -> (i32, i32) {
    %c0_i32 = arith.constant 0 : i32
    %c0_i32_0 = arith.constant 0 : i32
    return %arg0, %c0_i32 : i32, i32
  }
  func.func @transform_1(%arg0: i32) -> (i32, i32) {
    %c0_i32 = arith.constant 0 : i32
    %c0_i32_0 = arith.constant 0 : i32
    %c0_i32_1 = arith.constant 0 : i32
    return %c0_i32, %c0_i32_0 : i32, i32
  }
  func.func @transform_2(%arg0: i32) -> (i32, i32) {
    %c0_i32 = arith.constant 0 : i32
    %c0_i32_0 = arith.constant 0 : i32
    %c0_i32_1 = arith.constant 0 : i32
    return %c0_i32, %c0_i32_0 : i32, i32
  }
  func.func @transform_3(%arg0: i32) -> (i32, i32) {
    %c0_i32 = arith.constant 0 : i32
    %c0_i32_0 = arith.constant 0 : i32
    %c0_i32_1 = arith.constant 0 : i32
    return %c0_i32, %c0_i32_0 : i32, i32
  }
  func.func @transform_4(%arg0: i32) -> (i32, i32) {
    %c0_i32 = arith.constant 0 : i32
    %c0_i32_0 = arith.constant 0 : i32
    %c0_i32_1 = arith.constant 0 : i32
    return %c0_i32, %c0_i32_0 : i32, i32
  }
  func.func @transform_5(%arg0: i32) -> (i32, i32) {
    %c0_i32 = arith.constant 0 : i32
    %c0_i32_0 = arith.constant 0 : i32
    %c0_i32_1 = arith.constant 0 : i32
    return %c0_i32, %c0_i32_0 : i32, i32
  }
  func.func @transform_6(%arg0: i32) -> (i32, i32) {
    %c0_i32 = arith.constant 0 : i32
    %c0_i32_0 = arith.constant 0 : i32
    %c0_i32_1 = arith.constant 0 : i32
    return %c0_i32, %c0_i32_0 : i32, i32
  }
  func.func @transform_7(%arg0: i32) -> (i32, i32) {
    %c0_i32 = arith.constant 0 : i32
    %c0_i32_0 = arith.constant 0 : i32
    %c0_i32_1 = arith.constant 0 : i32
    return %c0_i32, %c0_i32_0 : i32, i32
  }
  func.func @transform_8(%arg0: i32) -> (i32, i32) {
    %c0_i32 = arith.constant 0 : i32
    %c0_i32_0 = arith.constant 0 : i32
    %c0_i32_1 = arith.constant 0 : i32
    return %c0_i32, %c0_i32_0 : i32, i32
  }
  func.func @transform_9(%arg0: i32) -> (i32, i32) {
    %c0_i32 = arith.constant 0 : i32
    %c0_i32_0 = arith.constant 0 : i32
    return %arg0, %c0_i32 : i32, i32
  }
}

</mosaic_0001>

<llo_original>
// kernel: tpu_custom_call.1
$region0: #{tpu_custom_call.1}
  #allocation0 [shape = 'u32[]', space=smem, size = 0x4, offset = 0x4, fixed_abs, tag = 'smem constant byte address 0x4 - core index']
  #allocation1 [shape = 'u32[144,128]{1,0:T(1,128)}', space=vmem, size = 0x12000, scoped, tag = 'internal scratch']
  %s0 = inlined_call_operand.hbm [shape: f32[8,128], index: 0, kind: input, shape index: {}]
  %s1 = inlined_call_operand.hbm [shape: f32[128,128], index: 1, kind: input, shape index: {}]
  %s2 = inlined_call_operand.vmem [shape: f32[1,128], index: 2, kind: input, shape index: {}]
  %s3 = inlined_call_operand.hbm [shape: f32[128,128], index: 3, kind: input, shape index: {}]
  %s4 = inlined_call_operand.vmem [shape: f32[1,128], index: 4, kind: input, shape index: {}]
  %s5 = inlined_call_operand.hbm [shape: f32[128,128], index: 5, kind: input, shape index: {}]
  %s6 = inlined_call_operand.vmem [shape: f32[1,128], index: 6, kind: input, shape index: {}]
  %s7 = inlined_call_operand.hbm [shape: f32[128,128], index: 7, kind: input, shape index: {}]
  %s8 = inlined_call_operand.vmem [shape: f32[1,128], index: 8, kind: input, shape index: {}]
  %s9 = inlined_call_operand.hbm [shape: f32[8,128], index: 9, kind: output, shape index: {}]
  %s10 = sld [smem:[#allocation0]]
  $region66: #{tpu_custom_call.1} parent=0
    _
  %s12 = ssub.s32 1, %s10
  %s13 = scalar_select 0, %s12, %s10
  $region1: #{tpu_custom_call.1} parent=0
    #allocation2 [shape = 'u8[4096]{0}', space=vmem, size = 0x1000, scoped, tag = 'input window, operand 0, single buffered']
    #allocation3 [shape = 's32[1]{0}', space=sflag, size = 0x4, scoped, tag = 'scoped memory for tpu_custom_call.1']
    #allocation4 [shape = 's32[1]{0}', space=sflag, size = 0x4, scoped, tag = 'scoped memory for tpu_custom_call.1']
    #allocation5 [shape = 'u8[65536]{0}', space=vmem, size = 0x10000, scoped, tag = 'input window, operand 1, single buffered']
    #allocation6 [shape = 's32[1]{0}', space=sflag, size = 0x4, scoped, tag = 'scoped memory for tpu_custom_call.1']
    #allocation7 [shape = 'u8[65536]{0}', space=vmem, size = 0x10000, scoped, tag = 'input window, operand 3, single buffered']
    #allocation8 [shape = 'u8[65536]{0}', space=vmem, size = 0x10000, scoped, tag = 'input window, operand 5, single buffered']
    #allocation9 [shape = 's32[1]{0}', space=sflag, size = 0x4, scoped, tag = 'scoped memory for tpu_custom_call.1']
    #allocation10 [shape = 'u8[65536]{0}', space=vmem, size = 0x10000, scoped, tag = 'input window, operand 7, single buffered']
    #allocation11 [shape = 'u8[4096]{0}', space=vmem, size = 0x1000, scoped, tag = 'output window, operand 0, single buffered']
    %14 = vsyncpa [#allocation3], 0
    %15 = vsyncpa [#allocation6], 0
    %16 = vsyncpa [#allocation9], 0
    %17 = vsyncpa [#allocation4], 0
    // Predicated region
    $region2: #{tpu_custom_call.1} parent=1 // pred_check
      _
    $region3: #{tpu_custom_call.1} parent=1 // pred_check_branch
      %19 = sbr.rel (0) target = $region5
    $region4: #{tpu_custom_call.1} parent=1 // pred_region
      %s21 = ssub.s32 128, 128
      %22 = vsyncadd [#allocation3], %s21
      %s24 = sshll.u32 [#allocation2], 4
      %s25 = int_to_ptr.vmem [resolvable:$true] %s24
      %27 = dma.hbm_to_vmem [thread:$0]  %s0, 128, %s25, [#allocation3]
    $region5: #{tpu_custom_call.1} parent=1 // pred_fallthru
      _
    // Predicated region
    $region6: #{tpu_custom_call.1} parent=1 // pred_check
      _
    $region7: #{tpu_custom_call.1} parent=1 // pred_check_branch
      %29 = sbr.rel (0) target = $region9
    $region8: #{tpu_custom_call.1} parent=1 // pred_region
      %s31 = ssub.s32 2048, 2048
      %32 = vsyncadd [#allocation6], %s31
      %s33 = sshll.u32 [#allocation5], 4
      %s34 = int_to_ptr.vmem [resolvable:$true] %s33
      %39 = dma.hbm_to_vmem [thread:$0]  %s1, 2048, %s34, [#allocation6], 128, 128, 8
    $region9: #{tpu_custom_call.1} parent=1 // pred_fallthru
      _
    // Predicated region
    $region10: #{tpu_custom_call.1} parent=1 // pred_check
      _
    $region11: #{tpu_custom_call.1} parent=1 // pred_check_branch
      %41 = sbr.rel (0) target = $region13
    $region12: #{tpu_custom_call.1} parent=1 // pred_region
      _
    $region13: #{tpu_custom_call.1} parent=1 // pred_fallthru
      _
    // Predicated region
    $region14: #{tpu_custom_call.1} parent=1 // pred_check
      _
    $region15: #{tpu_custom_call.1} parent=1 // pred_check_branch
      %43 = sbr.rel (0) target = $region17
    $region16: #{tpu_custom_call.1} parent=1 // pred_region
      %s45 = ssub.s32 2048, 2048
      %46 = vsyncadd [#allocation6], %s45
      %s47 = sshll.u32 [#allocation7], 4
      %s48 = int_to_ptr.vmem [resolvable:$true] %s47
      %53 = dma.hbm_to_vmem [thread:$0]  %s3, 2048, %s48, [#allocation6], 128, 128, 8
    $region17: #{tpu_custom_call.1} parent=1 // pred_fallthru
      _
    // Predicated region
    $region18: #{tpu_custom_call.1} parent=1 // pred_check
      _
    $region19: #{tpu_custom_call.1} parent=1 // pred_check_branch
      %55 = sbr.rel (0) target = $region21
    $region20: #{tpu_custom_call.1} parent=1 // pred_region
      _
    $region21: #{tpu_custom_call.1} parent=1 // pred_fallthru
      _
    // Predicated region
    $region22: #{tpu_custom_call.1} parent=1 // pred_check
      _
    $region23: #{tpu_custom_call.1} parent=1 // pred_check_branch
      %57 = sbr.rel (0) target = $region25
    $region24: #{tpu_custom_call.1} parent=1 // pred_region
      %s59 = ssub.s32 2048, 2048
      %60 = vsyncadd [#allocation9], %s59
      %s61 = sshll.u32 [#allocation8], 4
      %s62 = int_to_ptr.vmem [resolvable:$true] %s61
      %67 = dma.hbm_to_vmem [thread:$0]  %s5, 2048, %s62, [#allocation9], 128, 128, 8
    $region25: #{tpu_custom_call.1} parent=1 // pred_fallthru
      _
    // Predicated region
    $region26: #{tpu_custom_call.1} parent=1 // pred_check
      _
    $region27: #{tpu_custom_call.1} parent=1 // pred_check_branch
      %69 = sbr.rel (0) target = $region29
    $region28: #{tpu_custom_call.1} parent=1 // pred_region
      _
    $region29: #{tpu_custom_call.1} parent=1 // pred_fallthru
      _
    // Predicated region
    $region30: #{tpu_custom_call.1} parent=1 // pred_check
      _
    $region31: #{tpu_custom_call.1} parent=1 // pred_check_branch
      %71 = sbr.rel (0) target = $region33
    $region32: #{tpu_custom_call.1} parent=1 // pred_region
      %s73 = ssub.s32 2048, 2048
      %74 = vsyncadd [#allocation9], %s73
      %s75 = sshll.u32 [#allocation10], 4
      %s76 = int_to_ptr.vmem [resolvable:$true] %s75
      %81 = dma.hbm_to_vmem [thread:$0]  %s7, 2048, %s76, [#allocation9], 128, 128, 8
    $region33: #{tpu_custom_call.1} parent=1 // pred_fallthru
      _
    // Predicated region
    $region34: #{tpu_custom_call.1} parent=1 // pred_check
      _
    $region35: #{tpu_custom_call.1} parent=1 // pred_check_branch
      %83 = sbr.rel (0) target = $region37
    $region36: #{tpu_custom_call.1} parent=1 // pred_region
      _
    $region37: #{tpu_custom_call.1} parent=1 // pred_fallthru
      _
    // Predicated region
    $region38: #{tpu_custom_call.1} parent=1 // pred_check
      _
    $region39: #{tpu_custom_call.1} parent=1 // pred_check_branch
      %85 = sbr.rel (0) target = $region41
    $region40: #{tpu_custom_call.1} parent=1 // pred_region
      %86 = dma.done [#allocation3], 128
    $region41: #{tpu_custom_call.1} parent=1 // pred_fallthru
      _
    // Predicated region
    $region42: #{tpu_custom_call.1} parent=1 // pred_check
      _
    $region43: #{tpu_custom_call.1} parent=1 // pred_check_branch
      %88 = sbr.rel (0) target = $region45
    $region44: #{tpu_custom_call.1} parent=1 // pred_region
      %89 = dma.done [#allocation6], 2048
    $region45: #{tpu_custom_call.1} parent=1 // pred_fallthru
      _
    // Predicated region
    $region46: #{tpu_custom_call.1} parent=1 // pred_check
      _
    $region47: #{tpu_custom_call.1} parent=1 // pred_check_branch
      %91 = sbr.rel (0) target = $region49
    $region48: #{tpu_custom_call.1} parent=1 // pred_region
      %92 = dma.done [#allocation6], 2048
    $region49: #{tpu_custom_call.1} parent=1 // pred_fallthru
      _
    // Predicated region
    $region50: #{tpu_custom_call.1} parent=1 // pred_check
      _
    $region51: #{tpu_custom_call.1} parent=1 // pred_check_branch
      %94 = sbr.rel (0) target = $region53
    $region52: #{tpu_custom_call.1} parent=1 // pred_region
      %95 = dma.done [#allocation9], 2048
    $region53: #{tpu_custom_call.1} parent=1 // pred_fallthru
      _
    // Predicated region
    $region54: #{tpu_custom_call.1} parent=1 // pred_check
      _
    $region55: #{tpu_custom_call.1} parent=1 // pred_check_branch
      %97 = sbr.rel (0) target = $region57
    $region56: #{tpu_custom_call.1} parent=1 // pred_region
      %98 = dma.done [#allocation9], 2048
    $region57: #{tpu_custom_call.1} parent=1 // pred_fallthru
      _
    %v99 = vld [vmem:[#allocation2] sm:$0xff]
    %v100 = vld [vmem:[#allocation5] sm:$0xff]
    %v101 = vld [vmem:[#allocation5 + $0x8] sm:$0xff]
    %v102 = vld [vmem:[#allocation5 + $0x10] sm:$0xff]
    %v103 = vld [vmem:[#allocation5 + $0x18] sm:$0xff]
    %v104 = vld [vmem:[#allocation5 + $0x20] sm:$0xff]
    %v105 = vld [vmem:[#allocation5 + $0x28] sm:$0xff]
    %v106 = vld [vmem:[#allocation5 + $0x30] sm:$0xff]
    %v107 = vld [vmem:[#allocation5 + $0x38] sm:$0xff]
    %v108 = vld [vmem:[#allocation5 + $0x40] sm:$0xff]
    %v109 = vld [vmem:[#allocation5 + $0x48] sm:$0xff]
    %v110 = vld [vmem:[#allocation5 + $0x50] sm:$0xff]
    %v111 = vld [vmem:[#allocation5 + $0x58] sm:$0xff]
    %v112 = vld [vmem:[#allocation5 + $0x60] sm:$0xff]
    %v113 = vld [vmem:[#allocation5 + $0x68] sm:$0xff]
    %v114 = vld [vmem:[#allocation5 + $0x70] sm:$0xff]
    %v115 = vld [vmem:[#allocation5 + $0x78] sm:$0xff]
    %v116 = vld [vmem:[%s2] sm:$0x1]
    %v118 = vlaneseq
    %v119 = vshrl.u32 %v118, 7
    %v120 = vsub.s32 0, %v119
    %v121 = vrot.slane %v116, %v120
    %123 = vmatprep.subr.mxu0 0.0
    %124 = vmatpush1.msra.mxu0 %v115
    %125 = vmatprep.subr.mxu0 0.0
    %126 = vmatpush1.msra.mxu0 %v114
    %127 = vmatprep.subr.mxu0 0.0
    %128 = vmatpush1.msra.mxu0 %v113
    %129 = vmatprep.subr.mxu0 0.0
    %130 = vmatpush1.msra.mxu0 %v112
    %131 = vmatprep.subr.mxu0 0.0
    %132 = vmatpush1.msra.mxu0 %v111
    %133 = vmatprep.subr.mxu0 0.0
    %134 = vmatpush1.msra.mxu0 %v110
    %135 = vmatprep.subr.mxu0 0.0
    %136 = vmatpush1.msra.mxu0 %v109
    %137 = vmatprep.subr.mxu0 0.0
    %138 = vmatpush1.msra.mxu0 %v108
    %139 = vmatprep.subr.mxu0 0.0
    %140 = vmatpush1.msra.mxu0 %v107
    %141 = vmatprep.subr.mxu0 0.0
    %142 = vmatpush1.msra.mxu0 %v106
    %143 = vmatprep.subr.mxu0 0.0
    %144 = vmatpush1.msra.mxu0 %v105
    %145 = vmatprep.subr.mxu0 0.0
    %146 = vmatpush1.msra.mxu0 %v104
    %147 = vmatprep.subr.mxu0 0.0
    %148 = vmatpush1.msra.mxu0 %v103
    %149 = vmatprep.subr.mxu0 0.0
    %150 = vmatpush1.msra.mxu0 %v102
    %151 = vmatprep.subr.mxu0 0.0
    %152 = vmatpush1.msra.mxu0 %v101
    %153 = vmatprep.subr.mxu0 0.0
    %154 = vmatpush1.msra.mxu0 %v100
    %155 = vmatprep.subr.mxu0 0.0
    %156 = vmatpush2.msra.mxu0 0.0
    %157 = vmatprep.subr.mxu0 0.0
    %158 = vmatpush2.msra.mxu0 0.0
    %159 = vmatprep.subr.mxu0 0.0
    %160 = vmatpush2.msra.mxu0 0.0
    %161 = vmatprep.subr.mxu0 0.0
    %162 = vmatpush2.msra.mxu0 0.0
    %163 = vmatprep.subr.mxu0 0.0
    %164 = vmatpush2.msra.mxu0 0.0
    %165 = vmatprep.subr.mxu0 0.0
    %166 = vmatpush2.msra.mxu0 0.0
    %167 = vmatprep.subr.mxu0 0.0
    %168 = vmatpush2.msra.mxu0 0.0
    %169 = vmatprep.subr.mxu0 0.0
    %170 = vmatpush2.msra.mxu0 0.0
    %171 = vmatprep.subr.mxu0 0.0
    %172 = vmatpush2.msra.mxu0 0.0
    %173 = vmatprep.subr.mxu0 0.0
    %174 = vmatpush2.msra.mxu0 0.0
    %175 = vmatprep.subr.mxu0 0.0
    %176 = vmatpush2.msra.mxu0 0.0
    %177 = vmatprep.subr.mxu0 0.0
    %178 = vmatpush2.msra.mxu0 0.0
    %179 = vmatprep.subr.mxu0 0.0
    %180 = vmatpush2.msra.mxu0 0.0
    %181 = vmatprep.subr.mxu0 0.0
    %182 = vmatpush2.msra.mxu0 0.0
    %183 = vmatprep.subr.mxu0 0.0
    %184 = vmatpush2.msra.mxu0 0.0
    %185 = vmatprep.subr.mxu0 0.0
    %186 = vmatpush2.msra.mxu0 0.0
    %187 = vmatprep.mubr.f32.mxu0 0.0
    %188 = vmatmul.mubr.f32.gmra.mxu0 %v99
    %v189 = vpop.f32.mrf.mxu0
    %v190 = vadd.f32 %v121, %v189
    %v191 = vpop.f32.mrf.mxu0
    %192 = vdwg.mxu0
    %v193 = vmul.f32 %v190, 0.2
    %v194 = vmax.f32 %v190, %v193
    %v195 = vld [vmem:[#allocation7] sm:$0xff]
    %v196 = vld [vmem:[#allocation7 + $0x8] sm:$0xff]
    %v197 = vld [vmem:[#allocation7 + $0x10] sm:$0xff]
    %v198 = vld [vmem:[#allocation7 + $0x18] sm:$0xff]
    %v199 = vld [vmem:[#allocation7 + $0x20] sm:$0xff]
    %v200 = vld [vmem:[#allocation7 + $0x28] sm:$0xff]
    %v201 = vld [vmem:[#allocation7 + $0x30] sm:$0xff]
    %v202 = vld [vmem:[#allocation7 + $0x38] sm:$0xff]
    %v203 = vld [vmem:[#allocation7 + $0x40] sm:$0xff]
    %v204 = vld [vmem:[#allocation7 + $0x48] sm:$0xff]
    %v205 = vld [vmem:[#allocation7 + $0x50] sm:$0xff]
    %v206 = vld [vmem:[#allocation7 + $0x58] sm:$0xff]
    %v207 = vld [vmem:[#allocation7 + $0x60] sm:$0xff]
    %v208 = vld [vmem:[#allocation7 + $0x68] sm:$0xff]
    %v209 = vld [vmem:[#allocation7 + $0x70] sm:$0xff]
    %v210 = vld [vmem:[#allocation7 + $0x78] sm:$0xff]
    %v211 = vld [vmem:[%s4] sm:$0x1]
    %v213 = vlaneseq
    %v214 = vshrl.u32 %v213, 7
    %v215 = vsub.s32 0, %v214
    %v216 = vrot.slane %v211, %v215
    %218 = vmatprep.subr.mxu0 0.0
    %219 = vmatpush1.msra.mxu0 %v210
    %220 = vmatprep.subr.mxu0 0.0
    %221 = vmatpush1.msra.mxu0 %v209
    %222 = vmatprep.subr.mxu0 0.0
    %223 = vmatpush1.msra.mxu0 %v208
    %224 = vmatprep.subr.mxu0 0.0
    %225 = vmatpush1.msra.mxu0 %v207
    %226 = vmatprep.subr.mxu0 0.0
    %227 = vmatpush1.msra.mxu0 %v206
    %228 = vmatprep.subr.mxu0 0.0
    %229 = vmatpush1.msra.mxu0 %v205
    %230 = vmatprep.subr.mxu0 0.0
    %231 = vmatpush1.msra.mxu0 %v204
    %232 = vmatprep.subr.mxu0 0.0
    %233 = vmatpush1.msra.mxu0 %v203
    %234 = vmatprep.subr.mxu0 0.0
    %235 = vmatpush1.msra.mxu0 %v202
    %236 = vmatprep.subr.mxu0 0.0
    %237 = vmatpush1.msra.mxu0 %v201
    %238 = vmatprep.subr.mxu0 0.0
    %239 = vmatpush1.msra.mxu0 %v200
    %240 = vmatprep.subr.mxu0 0.0
    %241 = vmatpush1.msra.mxu0 %v199
    %242 = vmatprep.subr.mxu0 0.0
    %243 = vmatpush1.msra.mxu0 %v198
    %244 = vmatprep.subr.mxu0 0.0
    %245 = vmatpush1.msra.mxu0 %v197
    %246 = vmatprep.subr.mxu0 0.0
    %247 = vmatpush1.msra.mxu0 %v196
    %248 = vmatprep.subr.mxu0 0.0
    %249 = vmatpush1.msra.mxu0 %v195
    %250 = vmatprep.subr.mxu0 0.0
    %251 = vmatpush2.msra.mxu0 0.0
    %252 = vmatprep.subr.mxu0 0.0
    %253 = vmatpush2.msra.mxu0 0.0
    %254 = vmatprep.subr.mxu0 0.0
    %255 = vmatpush2.msra.mxu0 0.0
    %256 = vmatprep.subr.mxu0 0.0
    %257 = vmatpush2.msra.mxu0 0.0
    %258 = vmatprep.subr.mxu0 0.0
    %259 = vmatpush2.msra.mxu0 0.0
    %260 = vmatprep.subr.mxu0 0.0
    %261 = vmatpush2.msra.mxu0 0.0
    %262 = vmatprep.subr.mxu0 0.0
    %263 = vmatpush2.msra.mxu0 0.0
    %264 = vmatprep.subr.mxu0 0.0
    %265 = vmatpush2.msra.mxu0 0.0
    %266 = vmatprep.subr.mxu0 0.0
    %267 = vmatpush2.msra.mxu0 0.0
    %268 = vmatprep.subr.mxu0 0.0
    %269 = vmatpush2.msra.mxu0 0.0
    %270 = vmatprep.subr.mxu0 0.0
    %271 = vmatpush2.msra.mxu0 0.0
    %272 = vmatprep.subr.mxu0 0.0
    %273 = vmatpush2.msra.mxu0 0.0
    %274 = vmatprep.subr.mxu0 0.0
    %275 = vmatpush2.msra.mxu0 0.0
    %276 = vmatprep.subr.mxu0 0.0
    %277 = vmatpush2.msra.mxu0 0.0
    %278 = vmatprep.subr.mxu0 0.0
    %279 = vmatpush2.msra.mxu0 0.0
    %280 = vmatprep.subr.mxu0 0.0
    %281 = vmatpush2.msra.mxu0 0.0
    %282 = vmatprep.mubr.f32.mxu0 0.0
    %283 = vmatmul.mubr.f32.gmra.mxu0 %v194
    %v284 = vpop.f32.mrf.mxu0
    %v285 = vadd.f32 %v216, %v284
    %v286 = vpop.f32.mrf.mxu0
    %287 = vdwg.mxu0
    %v288 = vmul.f32 %v285, 0.2
    %v289 = vmax.f32 %v285, %v288
    %v290 = vld [vmem:[#allocation8] sm:$0xff]
    %v291 = vld [vmem:[#allocation8 + $0x8] sm:$0xff]
    %v292 = vld [vmem:[#allocation8 + $0x10] sm:$0xff]
    %v293 = vld [vmem:[#allocation8 + $0x18] sm:$0xff]
    %v294 = vld [vmem:[#allocation8 + $0x20] sm:$0xff]
    %v295 = vld [vmem:[#allocation8 + $0x28] sm:$0xff]
    %v296 = vld [vmem:[#allocation8 + $0x30] sm:$0xff]
    %v297 = vld [vmem:[#allocation8 + $0x38] sm:$0xff]
    %v298 = vld [vmem:[#allocation8 + $0x40] sm:$0xff]
    %v299 = vld [vmem:[#allocation8 + $0x48] sm:$0xff]
    %v300 = vld [vmem:[#allocation8 + $0x50] sm:$0xff]
    %v301 = vld [vmem:[#allocation8 + $0x58] sm:$0xff]
    %v302 = vld [vmem:[#allocation8 + $0x60] sm:$0xff]
    %v303 = vld [vmem:[#allocation8 + $0x68] sm:$0xff]
    %v304 = vld [vmem:[#allocation8 + $0x70] sm:$0xff]
    %v305 = vld [vmem:[#allocation8 + $0x78] sm:$0xff]
    %v306 = vld [vmem:[%s6] sm:$0x1]
    %v308 = vlaneseq
    %v309 = vshrl.u32 %v308, 7
    %v310 = vsub.s32 0, %v309
    %v311 = vrot.slane %v306, %v310
    %313 = vmatprep.subr.mxu0 0.0
    %314 = vmatpush1.msra.mxu0 %v305
    %315 = vmatprep.subr.mxu0 0.0
    %316 = vmatpush1.msra.mxu0 %v304
    %317 = vmatprep.subr.mxu0 0.0
    %318 = vmatpush1.msra.mxu0 %v303
    %319 = vmatprep.subr.mxu0 0.0
    %320 = vmatpush1.msra.mxu0 %v302
    %321 = vmatprep.subr.mxu0 0.0
    %322 = vmatpush1.msra.mxu0 %v301
    %323 = vmatprep.subr.mxu0 0.0
    %324 = vmatpush1.msra.mxu0 %v300
    %325 = vmatprep.subr.mxu0 0.0
    %326 = vmatpush1.msra.mxu0 %v299
    %327 = vmatprep.subr.mxu0 0.0
    %328 = vmatpush1.msra.mxu0 %v298
    %329 = vmatprep.subr.mxu0 0.0
    %330 = vmatpush1.msra.mxu0 %v297
    %331 = vmatprep.subr.mxu0 0.0
    %332 = vmatpush1.msra.mxu0 %v296
    %333 = vmatprep.subr.mxu0 0.0
    %334 = vmatpush1.msra.mxu0 %v295
    %335 = vmatprep.subr.mxu0 0.0
    %336 = vmatpush1.msra.mxu0 %v294
    %337 = vmatprep.subr.mxu0 0.0
    %338 = vmatpush1.msra.mxu0 %v293
    %339 = vmatprep.subr.mxu0 0.0
    %340 = vmatpush1.msra.mxu0 %v292
    %341 = vmatprep.subr.mxu0 0.0
    %342 = vmatpush1.msra.mxu0 %v291
    %343 = vmatprep.subr.mxu0 0.0
    %344 = vmatpush1.msra.mxu0 %v290
    %345 = vmatprep.subr.mxu0 0.0
    %346 = vmatpush2.msra.mxu0 0.0
    %347 = vmatprep.subr.mxu0 0.0
    %348 = vmatpush2.msra.mxu0 0.0
    %349 = vmatprep.subr.mxu0 0.0
    %350 = vmatpush2.msra.mxu0 0.0
    %351 = vmatprep.subr.mxu0 0.0
    %352 = vmatpush2.msra.mxu0 0.0
    %353 = vmatprep.subr.mxu0 0.0
    %354 = vmatpush2.msra.mxu0 0.0
    %355 = vmatprep.subr.mxu0 0.0
    %356 = vmatpush2.msra.mxu0 0.0
    %357 = vmatprep.subr.mxu0 0.0
    %358 = vmatpush2.msra.mxu0 0.0
    %359 = vmatprep.subr.mxu0 0.0
    %360 = vmatpush2.msra.mxu0 0.0
    %361 = vmatprep.subr.mxu0 0.0
    %362 = vmatpush2.msra.mxu0 0.0
    %363 = vmatprep.subr.mxu0 0.0
    %364 = vmatpush2.msra.mxu0 0.0
    %365 = vmatprep.subr.mxu0 0.0
    %366 = vmatpush2.msra.mxu0 0.0
    %367 = vmatprep.subr.mxu0 0.0
    %368 = vmatpush2.msra.mxu0 0.0
    %369 = vmatprep.subr.mxu0 0.0
    %370 = vmatpush2.msra.mxu0 0.0
    %371 = vmatprep.subr.mxu0 0.0
    %372 = vmatpush2.msra.mxu0 0.0
    %373 = vmatprep.subr.mxu0 0.0
    %374 = vmatpush2.msra.mxu0 0.0
    %375 = vmatprep.subr.mxu0 0.0
    %376 = vmatpush2.msra.mxu0 0.0
    %377 = vmatprep.mubr.f32.mxu0 0.0
    %378 = vmatmul.mubr.f32.gmra.mxu0 %v289
    %v379 = vpop.f32.mrf.mxu0
    %v380 = vadd.f32 %v311, %v379
    %v381 = vpop.f32.mrf.mxu0
    %382 = vdwg.mxu0
    %v383 = vmul.f32 %v380, 0.2
    %v384 = vmax.f32 %v380, %v383
    %v385 = vld [vmem:[#allocation10] sm:$0xff]
    %v386 = vld [vmem:[#allocation10 + $0x8] sm:$0xff]
    %v387 = vld [vmem:[#allocation10 + $0x10] sm:$0xff]
    %v388 = vld [vmem:[#allocation10 + $0x18] sm:$0xff]
    %v389 = vld [vmem:[#allocation10 + $0x20] sm:$0xff]
    %v390 = vld [vmem:[#allocation10 + $0x28] sm:$0xff]
    %v391 = vld [vmem:[#allocation10 + $0x30] sm:$0xff]
    %v392 = vld [vmem:[#allocation10 + $0x38] sm:$0xff]
    %v393 = vld [vmem:[#allocation10 + $0x40] sm:$0xff]
    %v394 = vld [vmem:[#allocation10 + $0x48] sm:$0xff]
    %v395 = vld [vmem:[#allocation10 + $0x50] sm:$0xff]
    %v396 = vld [vmem:[#allocation10 + $0x58] sm:$0xff]
    %v397 = vld [vmem:[#allocation10 + $0x60] sm:$0xff]
    %v398 = vld [vmem:[#allocation10 + $0x68] sm:$0xff]
    %v399 = vld [vmem:[#allocation10 + $0x70] sm:$0xff]
    %v400 = vld [vmem:[#allocation10 + $0x78] sm:$0xff]
    %v401 = vld [vmem:[%s8] sm:$0x1]
    %v403 = vlaneseq
    %v404 = vshrl.u32 %v403, 7
    %v405 = vsub.s32 0, %v404
    %v406 = vrot.slane %v401, %v405
    %408 = vmatprep.subr.mxu0 0.0
    %409 = vmatpush1.msra.mxu0 %v400
    %410 = vmatprep.subr.mxu0 0.0
    %411 = vmatpush1.msra.mxu0 %v399
    %412 = vmatprep.subr.mxu0 0.0
    %413 = vmatpush1.msra.mxu0 %v398
    %414 = vmatprep.subr.mxu0 0.0
    %415 = vmatpush1.msra.mxu0 %v397
    %416 = vmatprep.subr.mxu0 0.0
    %417 = vmatpush1.msra.mxu0 %v396
    %418 = vmatprep.subr.mxu0 0.0
    %419 = vmatpush1.msra.mxu0 %v395
    %420 = vmatprep.subr.mxu0 0.0
    %421 = vmatpush1.msra.mxu0 %v394
    %422 = vmatprep.subr.mxu0 0.0
    %423 = vmatpush1.msra.mxu0 %v393
    %424 = vmatprep.subr.mxu0 0.0
    %425 = vmatpush1.msra.mxu0 %v392
    %426 = vmatprep.subr.mxu0 0.0
    %427 = vmatpush1.msra.mxu0 %v391
    %428 = vmatprep.subr.mxu0 0.0
    %429 = vmatpush1.msra.mxu0 %v390
    %430 = vmatprep.subr.mxu0 0.0
    %431 = vmatpush1.msra.mxu0 %v389
    %432 = vmatprep.subr.mxu0 0.0
    %433 = vmatpush1.msra.mxu0 %v388
    %434 = vmatprep.subr.mxu0 0.0
    %435 = vmatpush1.msra.mxu0 %v387
    %436 = vmatprep.subr.mxu0 0.0
    %437 = vmatpush1.msra.mxu0 %v386
    %438 = vmatprep.subr.mxu0 0.0
    %439 = vmatpush1.msra.mxu0 %v385
    %440 = vmatprep.subr.mxu0 0.0
    %441 = vmatpush2.msra.mxu0 0.0
    %442 = vmatprep.subr.mxu0 0.0
    %443 = vmatpush2.msra.mxu0 0.0
    %444 = vmatprep.subr.mxu0 0.0
    %445 = vmatpush2.msra.mxu0 0.0
    %446 = vmatprep.subr.mxu0 0.0
    %447 = vmatpush2.msra.mxu0 0.0
    %448 = vmatprep.subr.mxu0 0.0
    %449 = vmatpush2.msra.mxu0 0.0
    %450 = vmatprep.subr.mxu0 0.0
    %451 = vmatpush2.msra.mxu0 0.0
    %452 = vmatprep.subr.mxu0 0.0
    %453 = vmatpush2.msra.mxu0 0.0
    %454 = vmatprep.subr.mxu0 0.0
    %455 = vmatpush2.msra.mxu0 0.0
    %456 = vmatprep.subr.mxu0 0.0
    %457 = vmatpush2.msra.mxu0 0.0
    %458 = vmatprep.subr.mxu0 0.0
    %459 = vmatpush2.msra.mxu0 0.0
    %460 = vmatprep.subr.mxu0 0.0
    %461 = vmatpush2.msra.mxu0 0.0
    %462 = vmatprep.subr.mxu0 0.0
    %463 = vmatpush2.msra.mxu0 0.0
    %464 = vmatprep.subr.mxu0 0.0
    %465 = vmatpush2.msra.mxu0 0.0
    %466 = vmatprep.subr.mxu0 0.0
    %467 = vmatpush2.msra.mxu0 0.0
    %468 = vmatprep.subr.mxu0 0.0
    %469 = vmatpush2.msra.mxu0 0.0
    %470 = vmatprep.subr.mxu0 0.0
    %471 = vmatpush2.msra.mxu0 0.0
    %472 = vmatprep.mubr.f32.mxu0 0.0
    %473 = vmatmul.mubr.f32.gmra.mxu0 %v384
    %v474 = vpop.f32.mrf.mxu0
    %v475 = vadd.f32 %v406, %v474
    %v476 = vpop.f32.mrf.mxu0
    %477 = vdwg.mxu0
    %478 = vst [vmem:[#allocation11] sm:$0xff] %v475
    // Predicated region
    $region58: #{tpu_custom_call.1} parent=1 // pred_check
      _
    $region59: #{tpu_custom_call.1} parent=1 // pred_check_branch
      %480 = sbr.rel (0) target = $region61
    $region60: #{tpu_custom_call.1} parent=1 // pred_region
      %s482 = ssub.s32 128, 128
      %483 = vsyncadd [#allocation4], %s482
      %s485 = sshll.u32 [#allocation11], 4
      %s486 = int_to_ptr.vmem [resolvable:$true] %s485
      %488 = dma.vmem_to_hbm [thread:$0]  %s486, 128, %s9, [#allocation4]
    $region61: #{tpu_custom_call.1} parent=1 // pred_fallthru
      _
    // Predicated region
    $region62: #{tpu_custom_call.1} parent=1 // pred_check
      _
    $region63: #{tpu_custom_call.1} parent=1 // pred_check_branch
      %490 = sbr.rel (0) target = $region65
    $region64: #{tpu_custom_call.1} parent=1 // pred_region
      %491 = dma.done [#allocation4], 128
    $region65: #{tpu_custom_call.1} parent=1 // pred_fallthru
      _
    %492 = vsyncpa [#allocation3], 1
    %493 = vsyncpa [#allocation6], 1
    %494 = vsyncpa [#allocation9], 1
    %495 = vsyncpa [#allocation4], 1

// kernel: tpu_custom_call.1
$region0: #{tpu_custom_call.1}
  #allocation0 [shape = 'u32[]', space=smem, size = 0x4, offset = 0x4, fixed_abs, tag = 'smem constant byte address 0x4 - core index']
  #allocation1 [shape = 'u32[144,128]{1,0:T(1,128)}', space=vmem, size = 0x12000, scoped, tag = 'internal scratch']
  %s0 = inlined_call_operand.hbm [shape: f32[8,128], index: 0, kind: input, shape index: {}]
  %s1 = inlined_call_operand.hbm [shape: f32[128,128], index: 1, kind: input, shape index: {}]
  %s2 = inlined_call_operand.vmem [shape: f32[1,128], index: 2, kind: input, shape index: {}]
  %s3 = inlined_call_operand.hbm [shape: f32[128,128], index: 3, kind: input, shape index: {}]
  %s4 = inlined_call_operand.vmem [shape: f32[1,128], index: 4, kind: input, shape index: {}]
  %s5 = inlined_call_operand.hbm [shape: f32[128,128], index: 5, kind: input, shape index: {}]
  %s6 = inlined_call_operand.vmem [shape: f32[1,128], index: 6, kind: input, shape index: {}]
  %s7 = inlined_call_operand.hbm [shape: f32[128,128], index: 7, kind: input, shape index: {}]
  %s8 = inlined_call_operand.vmem [shape: f32[1,128], index: 8, kind: input, shape index: {}]
  %s9 = inlined_call_operand.hbm [shape: f32[8,128], index: 9, kind: output, shape index: {}]
  %s10 = sld [smem:[#allocation0]]
  $region66: #{tpu_custom_call.1} parent=0
    _
  %s12 = ssub.s32 1, %s10
  %s13 = scalar_select 0, %s12, %s10
  $region1: #{tpu_custom_call.1} parent=0
    #allocation2 [shape = 'u8[4096]{0}', space=vmem, size = 0x1000, scoped, tag = 'input window, operand 0, single buffered']
    #allocation3 [shape = 's32[1]{0}', space=sflag, size = 0x4, scoped, tag = 'scoped memory for tpu_custom_call.1']
    #allocation4 [shape = 's32[1]{0}', space=sflag, size = 0x4, scoped, tag = 'scoped memory for tpu_custom_call.1']
    #allocation5 [shape = 'u8[65536]{0}', space=vmem, size = 0x10000, scoped, tag = 'input window, operand 1, single buffered']
    #allocation6 [shape = 's32[1]{0}', space=sflag, size = 0x4, scoped, tag = 'scoped memory for tpu_custom_call.1']
    #allocation7 [shape = 'u8[65536]{0}', space=vmem, size = 0x10000, scoped, tag = 'input window, operand 3, single buffered']
    #allocation8 [shape = 'u8[65536]{0}', space=vmem, size = 0x10000, scoped, tag = 'input window, operand 5, single buffered']
    #allocation9 [shape = 's32[1]{0}', space=sflag, size = 0x4, scoped, tag = 'scoped memory for tpu_custom_call.1']
    #allocation10 [shape = 'u8[65536]{0}', space=vmem, size = 0x10000, scoped, tag = 'input window, operand 7, single buffered']
    #allocation11 [shape = 'u8[4096]{0}', space=vmem, size = 0x1000, scoped, tag = 'output window, operand 0, single buffered']
    %14 = vsyncpa [#allocation3], 0
    %15 = vsyncpa [#allocation6], 0
    %16 = vsyncpa [#allocation9], 0
    %17 = vsyncpa [#allocation4], 0
    // Predicated region
    $region2: #{tpu_custom_call.1} parent=1 // pred_check
      _
    $region3: #{tpu_custom_call.1} parent=1 // pred_check_branch
      %19 = sbr.rel (0) target = $region5
    $region4: #{tpu_custom_call.1} parent=1 // pred_region
      %s21 = ssub.s32 128, 128
      %22 = vsyncadd [#allocation3], %s21
      %s24 = sshll.u32 [#allocation2], 4
      %s25 = int_to_ptr.vmem [resolvable:$true] %s24
      %27 = dma.hbm_to_vmem [thread:$0]  %s0, 128, %s25, [#allocation3]
    $region5: #{tpu_custom_call.1} parent=1 // pred_fallthru
      _
    // Predicated region
    $region6: #{tpu_custom_call.1} parent=1 // pred_check
      _
    $region7: #{tpu_custom_call.1} parent=1 // pred_check_branch
      %29 = sbr.rel (0) target = $region9
    $region8: #{tpu_custom_call.1} parent=1 // pred_region
      %s31 = ssub.s32 2048, 2048
      %32 = vsyncadd [#allocation6], %s31
      %s33 = sshll.u32 [#allocation5], 4
      %s34 = int_to_ptr.vmem [resolvable:$true] %s33
      %39 = dma.hbm_to_vmem [thread:$0]  %s1, 2048, %s34, [#allocation6], 128, 128, 8
    $region9: #{tpu_custom_call.1} parent=1 // pred_fallthru
      _
    // Predicated region
    $region10: #{tpu_custom_call.1} parent=1 // pred_check
      _
    $region11: #{tpu_custom_call.1} parent=1 // pred_check_branch
      %41 = sbr.rel (0) target = $region13
    $region12: #{tpu_custom_call.1} parent=1 // pred_region
      _
    $region13: #{tpu_custom_call.1} parent=1 // pred_fallthru
      _
    // Predicated region
    $region14: #{tpu_custom_call.1} parent=1 // pred_check
      _
    $region15: #{tpu_custom_call.1} parent=1 // pred_check_branch
      %43 = sbr.rel (0) target = $region17
    $region16: #{tpu_custom_call.1} parent=1 // pred_region
      %s45 = ssub.s32 2048, 2048
      %46 = vsyncadd [#allocation6], %s45
      %s47 = sshll.u32 [#allocation7], 4
      %s48 = int_to_ptr.vmem [resolvable:$true] %s47
      %53 = dma.hbm_to_vmem [thread:$0]  %s3, 2048, %s48, [#allocation6], 128, 128, 8
    $region17: #{tpu_custom_call.1} parent=1 // pred_fallthru
      _
    // Predicated region
    $region18: #{tpu_custom_call.1} parent=1 // pred_check
      _
    $region19: #{tpu_custom_call.1} parent=1 // pred_check_branch
      %55 = sbr.rel (0) target = $region21
    $region20: #{tpu_custom_call.1} parent=1 // pred_region
      _
    $region21: #{tpu_custom_call.1} parent=1 // pred_fallthru
      _
    // Predicated region
    $region22: #{tpu_custom_call.1} parent=1 // pred_check
      _
    $region23: #{tpu_custom_call.1} parent=1 // pred_check_branch
      %57 = sbr.rel (0) target = $region25
    $region24: #{tpu_custom_call.1} parent=1 // pred_region
      %s59 = ssub.s32 2048, 2048
      %60 = vsyncadd [#allocation9], %s59
      %s61 = sshll.u32 [#allocation8], 4
      %s62 = int_to_ptr.vmem [resolvable:$true] %s61
      %67 = dma.hbm_to_vmem [thread:$0]  %s5, 2048, %s62, [#allocation9], 128, 128, 8
    $region25: #{tpu_custom_call.1} parent=1 // pred_fallthru
      _
    // Predicated region
    $region26: #{tpu_custom_call.1} parent=1 // pred_check
      _
    $region27: #{tpu_custom_call.1} parent=1 // pred_check_branch
      %69 = sbr.rel (0) target = $region29
    $region28: #{tpu_custom_call.1} parent=1 // pred_region
      _
    $region29: #{tpu_custom_call.1} parent=1 // pred_fallthru
      _
    // Predicated region
    $region30: #{tpu_custom_call.1} parent=1 // pred_check
      _
    $region31: #{tpu_custom_call.1} parent=1 // pred_check_branch
      %71 = sbr.rel (0) target = $region33
    $region32: #{tpu_custom_call.1} parent=1 // pred_region
      %s73 = ssub.s32 2048, 2048
      %74 = vsyncadd [#allocation9], %s73
      %s75 = sshll.u32 [#allocation10], 4
      %s76 = int_to_ptr.vmem [resolvable:$true] %s75
      %81 = dma.hbm_to_vmem [thread:$0]  %s7, 2048, %s76, [#allocation9], 128, 128, 8
    $region33: #{tpu_custom_call.1} parent=1 // pred_fallthru
      _
    // Predicated region
    $region34: #{tpu_custom_call.1} parent=1 // pred_check
      _
    $region35: #{tpu_custom_call.1} parent=1 // pred_check_branch
      %83 = sbr.rel (0) target = $region37
    $region36: #{tpu_custom_call.1} parent=1 // pred_region
      _
    $region37: #{tpu_custom_call.1} parent=1 // pred_fallthru
      _
    // Predicated region
    $region38: #{tpu_custom_call.1} parent=1 // pred_check
      _
    $region39: #{tpu_custom_call.1} parent=1 // pred_check_branch
      %85 = sbr.rel (0) target = $region41
    $region40: #{tpu_custom_call.1} parent=1 // pred_region
      %86 = dma.done [#allocation3], 128
    $region41: #{tpu_custom_call.1} parent=1 // pred_fallthru
      _
    // Predicated region
    $region42: #{tpu_custom_call.1} parent=1 // pred_check
      _
    $region43: #{tpu_custom_call.1} parent=1 // pred_check_branch
      %88 = sbr.rel (0) target = $region45
    $region44: #{tpu_custom_call.1} parent=1 // pred_region
      %89 = dma.done [#allocation6], 2048
    $region45: #{tpu_custom_call.1} parent=1 // pred_fallthru
      _
    // Predicated region
    $region46: #{tpu_custom_call.1} parent=1 // pred_check
      _
    $region47: #{tpu_custom_call.1} parent=1 // pred_check_branch
      %91 = sbr.rel (0) target = $region49
    $region48: #{tpu_custom_call.1} parent=1 // pred_region
      %92 = dma.done [#allocation6], 2048
    $region49: #{tpu_custom_call.1} parent=1 // pred_fallthru
      _
    // Predicated region
    $region50: #{tpu_custom_call.1} parent=1 // pred_check
      _
    $region51: #{tpu_custom_call.1} parent=1 // pred_check_branch
      %94 = sbr.rel (0) target = $region53
    $region52: #{tpu_custom_call.1} parent=1 // pred_region
      %95 = dma.done [#allocation9], 2048
    $region53: #{tpu_custom_call.1} parent=1 // pred_fallthru
      _
    // Predicated region
    $region54: #{tpu_custom_call.1} parent=1 // pred_check
      _
    $region55: #{tpu_custom_call.1} parent=1 // pred_check_branch
      %97 = sbr.rel (0) target = $region57
    $region56: #{tpu_custom_call.1} parent=1 // pred_region
      %98 = dma.done [#allocation9], 2048
    $region57: #{tpu_custom_call.1} parent=1 // pred_fallthru
      _
    %v99 = vld [vmem:[#allocation2] sm:$0xff]
    %v100 = vld [vmem:[#allocation5] sm:$0xff]
    %v101 = vld [vmem:[#allocation5 + $0x8] sm:$0xff]
    %v102 = vld [vmem:[#allocation5 + $0x10] sm:$0xff]
    %v103 = vld [vmem:[#allocation5 + $0x18] sm:$0xff]
    %v104 = vld [vmem:[#allocation5 + $0x20] sm:$0xff]
    %v105 = vld [vmem:[#allocation5 + $0x28] sm:$0xff]
    %v106 = vld [vmem:[#allocation5 + $0x30] sm:$0xff]
    %v107 = vld [vmem:[#allocation5 + $0x38] sm:$0xff]
    %v108 = vld [vmem:[#allocation5 + $0x40] sm:$0xff]
    %v109 = vld [vmem:[#allocation5 + $0x48] sm:$0xff]
    %v110 = vld [vmem:[#allocation5 + $0x50] sm:$0xff]
    %v111 = vld [vmem:[#allocation5 + $0x58] sm:$0xff]
    %v112 = vld [vmem:[#allocation5 + $0x60] sm:$0xff]
    %v113 = vld [vmem:[#allocation5 + $0x68] sm:$0xff]
    %v114 = vld [vmem:[#allocation5 + $0x70] sm:$0xff]
    %v115 = vld [vmem:[#allocation5 + $0x78] sm:$0xff]
    %v116 = vld [vmem:[%s2] sm:$0x1]
    %v118 = vlaneseq
    %v119 = vshrl.u32 %v118, 7
    %v120 = vsub.s32 0, %v119
    %v121 = vrot.slane %v116, %v120
    %123 = vmatprep.subr.mxu0 0.0
    %124 = vmatpush1.msra.mxu0 %v115
    %125 = vmatprep.subr.mxu0 0.0
    %126 = vmatpush1.msra.mxu0 %v114
    %127 = vmatprep.subr.mxu0 0.0
    %128 = vmatpush1.msra.mxu0 %v113
    %129 = vmatprep.subr.mxu0 0.0
    %130 = vmatpush1.msra.mxu0 %v112
    %131 = vmatprep.subr.mxu0 0.0
    %132 = vmatpush1.msra.mxu0 %v111
    %133 = vmatprep.subr.mxu0 0.0
    %134 = vmatpush1.msra.mxu0 %v110
    %135 = vmatprep.subr.mxu0 0.0
    %136 = vmatpush1.msra.mxu0 %v109
    %137 = vmatprep.subr.mxu0 0.0
    %138 = vmatpush1.msra.mxu0 %v108
    %139 = vmatprep.subr.mxu0 0.0
    %140 = vmatpush1.msra.mxu0 %v107
    %141 = vmatprep.subr.mxu0 0.0
    %142 = vmatpush1.msra.mxu0 %v106
    %143 = vmatprep.subr.mxu0 0.0
    %144 = vmatpush1.msra.mxu0 %v105
    %145 = vmatprep.subr.mxu0 0.0
    %146 = vmatpush1.msra.mxu0 %v104
    %147 = vmatprep.subr.mxu0 0.0
    %148 = vmatpush1.msra.mxu0 %v103
    %149 = vmatprep.subr.mxu0 0.0
    %150 = vmatpush1.msra.mxu0 %v102
    %151 = vmatprep.subr.mxu0 0.0
    %152 = vmatpush1.msra.mxu0 %v101
    %153 = vmatprep.subr.mxu0 0.0
    %154 = vmatpush1.msra.mxu0 %v100
    %155 = vmatprep.subr.mxu0 0.0
    %156 = vmatpush2.msra.mxu0 0.0
    %157 = vmatprep.subr.mxu0 0.0
    %158 = vmatpush2.msra.mxu0 0.0
    %159 = vmatprep.subr.mxu0 0.0
    %160 = vmatpush2.msra.mxu0 0.0
    %161 = vmatprep.subr.mxu0 0.0
    %162 = vmatpush2.msra.mxu0 0.0
    %163 = vmatprep.subr.mxu0 0.0
    %164 = vmatpush2.msra.mxu0 0.0
    %165 = vmatprep.subr.mxu0 0.0
    %166 = vmatpush2.msra.mxu0 0.0
    %167 = vmatprep.subr.mxu0 0.0
    %168 = vmatpush2.msra.mxu0 0.0
    %169 = vmatprep.subr.mxu0 0.0
    %170 = vmatpush2.msra.mxu0 0.0
    %171 = vmatprep.subr.mxu0 0.0
    %172 = vmatpush2.msra.mxu0 0.0
    %173 = vmatprep.subr.mxu0 0.0
    %174 = vmatpush2.msra.mxu0 0.0
    %175 = vmatprep.subr.mxu0 0.0
    %176 = vmatpush2.msra.mxu0 0.0
    %177 = vmatprep.subr.mxu0 0.0
    %178 = vmatpush2.msra.mxu0 0.0
    %179 = vmatprep.subr.mxu0 0.0
    %180 = vmatpush2.msra.mxu0 0.0
    %181 = vmatprep.subr.mxu0 0.0
    %182 = vmatpush2.msra.mxu0 0.0
    %183 = vmatprep.subr.mxu0 0.0
    %184 = vmatpush2.msra.mxu0 0.0
    %185 = vmatprep.subr.mxu0 0.0
    %186 = vmatpush2.msra.mxu0 0.0
    %187 = vmatprep.mubr.f32.mxu0 0.0
    %188 = vmatmul.mubr.f32.gmra.mxu0 %v99
    %v189 = vpop.f32.mrf.mxu0
    %v190 = vadd.f32 %v121, %v189
    %v191 = vpop.f32.mrf.mxu0
    %192 = vdwg.mxu0
    %v193 = vmul.f32 %v190, 0.2
    %v194 = vmax.f32 %v190, %v193
    %v195 = vld [vmem:[#allocation7] sm:$0xff]
    %v196 = vld [vmem:[#allocation7 + $0x8] sm:$0xff]
    %v197 = vld [vmem:[#allocation7 + $0x10] sm:$0xff]
    %v198 = vld [vmem:[#allocation7 + $0x18] sm:$0xff]
    %v199 = vld [vmem:[#allocation7 + $0x20] sm:$0xff]
    %v200 = vld [vmem:[#allocation7 + $0x28] sm:$0xff]
    %v201 = vld [vmem:[#allocation7 + $0x30] sm:$0xff]
    %v202 = vld [vmem:[#allocation7 + $0x38] sm:$0xff]
    %v203 = vld [vmem:[#allocation7 + $0x40] sm:$0xff]
    %v204 = vld [vmem:[#allocation7 + $0x48] sm:$0xff]
    %v205 = vld [vmem:[#allocation7 + $0x50] sm:$0xff]
    %v206 = vld [vmem:[#allocation7 + $0x58] sm:$0xff]
    %v207 = vld [vmem:[#allocation7 + $0x60] sm:$0xff]
    %v208 = vld [vmem:[#allocation7 + $0x68] sm:$0xff]
    %v209 = vld [vmem:[#allocation7 + $0x70] sm:$0xff]
    %v210 = vld [vmem:[#allocation7 + $0x78] sm:$0xff]
    %v211 = vld [vmem:[%s4] sm:$0x1]
    %v213 = vlaneseq
    %v214 = vshrl.u32 %v213, 7
    %v215 = vsub.s32 0, %v214
    %v216 = vrot.slane %v211, %v215
    %218 = vmatprep.subr.mxu0 0.0
    %219 = vmatpush1.msra.mxu0 %v210
    %220 = vmatprep.subr.mxu0 0.0
    %221 = vmatpush1.msra.mxu0 %v209
    %222 = vmatprep.subr.mxu0 0.0
    %223 = vmatpush1.msra.mxu0 %v208
    %224 = vmatprep.subr.mxu0 0.0
    %225 = vmatpush1.msra.mxu0 %v207
    %226 = vmatprep.subr.mxu0 0.0
    %227 = vmatpush1.msra.mxu0 %v206
    %228 = vmatprep.subr.mxu0 0.0
    %229 = vmatpush1.msra.mxu0 %v205
    %230 = vmatprep.subr.mxu0 0.0
    %231 = vmatpush1.msra.mxu0 %v204
    %232 = vmatprep.subr.mxu0 0.0
    %233 = vmatpush1.msra.mxu0 %v203
    %234 = vmatprep.subr.mxu0 0.0
    %235 = vmatpush1.msra.mxu0 %v202
    %236 = vmatprep.subr.mxu0 0.0
    %237 = vmatpush1.msra.mxu0 %v201
    %238 = vmatprep.subr.mxu0 0.0
    %239 = vmatpush1.msra.mxu0 %v200
    %240 = vmatprep.subr.mxu0 0.0
    %241 = vmatpush1.msra.mxu0 %v199
    %242 = vmatprep.subr.mxu0 0.0
    %243 = vmatpush1.msra.mxu0 %v198
    %244 = vmatprep.subr.mxu0 0.0
    %245 = vmatpush1.msra.mxu0 %v197
    %246 = vmatprep.subr.mxu0 0.0
    %247 = vmatpush1.msra.mxu0 %v196
    %248 = vmatprep.subr.mxu0 0.0
    %249 = vmatpush1.msra.mxu0 %v195
    %250 = vmatprep.subr.mxu0 0.0
    %251 = vmatpush2.msra.mxu0 0.0
    %252 = vmatprep.subr.mxu0 0.0
    %253 = vmatpush2.msra.mxu0 0.0
    %254 = vmatprep.subr.mxu0 0.0
    %255 = vmatpush2.msra.mxu0 0.0
    %256 = vmatprep.subr.mxu0 0.0
    %257 = vmatpush2.msra.mxu0 0.0
    %258 = vmatprep.subr.mxu0 0.0
    %259 = vmatpush2.msra.mxu0 0.0
    %260 = vmatprep.subr.mxu0 0.0
    %261 = vmatpush2.msra.mxu0 0.0
    %262 = vmatprep.subr.mxu0 0.0
    %263 = vmatpush2.msra.mxu0 0.0
    %264 = vmatprep.subr.mxu0 0.0
    %265 = vmatpush2.msra.mxu0 0.0
    %266 = vmatprep.subr.mxu0 0.0
    %267 = vmatpush2.msra.mxu0 0.0
    %268 = vmatprep.subr.mxu0 0.0
    %269 = vmatpush2.msra.mxu0 0.0
    %270 = vmatprep.subr.mxu0 0.0
    %271 = vmatpush2.msra.mxu0 0.0
    %272 = vmatprep.subr.mxu0 0.0
    %273 = vmatpush2.msra.mxu0 0.0
    %274 = vmatprep.subr.mxu0 0.0
    %275 = vmatpush2.msra.mxu0 0.0
    %276 = vmatprep.subr.mxu0 0.0
    %277 = vmatpush2.msra.mxu0 0.0
    %278 = vmatprep.subr.mxu0 0.0
    %279 = vmatpush2.msra.mxu0 0.0
    %280 = vmatprep.subr.mxu0 0.0
    %281 = vmatpush2.msra.mxu0 0.0
    %282 = vmatprep.mubr.f32.mxu0 0.0
    %283 = vmatmul.mubr.f32.gmra.mxu0 %v194
    %v284 = vpop.f32.mrf.mxu0
    %v285 = vadd.f32 %v216, %v284
    %v286 = vpop.f32.mrf.mxu0
    %287 = vdwg.mxu0
    %v288 = vmul.f32 %v285, 0.2
    %v289 = vmax.f32 %v285, %v288
    %v290 = vld [vmem:[#allocation8] sm:$0xff]
    %v291 = vld [vmem:[#allocation8 + $0x8] sm:$0xff]
    %v292 = vld [vmem:[#allocation8 + $0x10] sm:$0xff]
    %v293 = vld [vmem:[#allocation8 + $0x18] sm:$0xff]
    %v294 = vld [vmem:[#allocation8 + $0x20] sm:$0xff]
    %v295 = vld [vmem:[#allocation8 + $0x28] sm:$0xff]
    %v296 = vld [vmem:[#allocation8 + $0x30] sm:$0xff]
    %v297 = vld [vmem:[#allocation8 + $0x38] sm:$0xff]
    %v298 = vld [vmem:[#allocation8 + $0x40] sm:$0xff]
    %v299 = vld [vmem:[#allocation8 + $0x48] sm:$0xff]
    %v300 = vld [vmem:[#allocation8 + $0x50] sm:$0xff]
    %v301 = vld [vmem:[#allocation8 + $0x58] sm:$0xff]
    %v302 = vld [vmem:[#allocation8 + $0x60] sm:$0xff]
    %v303 = vld [vmem:[#allocation8 + $0x68] sm:$0xff]
    %v304 = vld [vmem:[#allocation8 + $0x70] sm:$0xff]
    %v305 = vld [vmem:[#allocation8 + $0x78] sm:$0xff]
    %v306 = vld [vmem:[%s6] sm:$0x1]
    %v308 = vlaneseq
    %v309 = vshrl.u32 %v308, 7
    %v310 = vsub.s32 0, %v309
    %v311 = vrot.slane %v306, %v310
    %313 = vmatprep.subr.mxu0 0.0
    %314 = vmatpush1.msra.mxu0 %v305
    %315 = vmatprep.subr.mxu0 0.0
    %316 = vmatpush1.msra.mxu0 %v304
    %317 = vmatprep.subr.mxu0 0.0
    %318 = vmatpush1.msra.mxu0 %v303
    %319 = vmatprep.subr.mxu0 0.0
    %320 = vmatpush1.msra.mxu0 %v302
    %321 = vmatprep.subr.mxu0 0.0
    %322 = vmatpush1.msra.mxu0 %v301
    %323 = vmatprep.subr.mxu0 0.0
    %324 = vmatpush1.msra.mxu0 %v300
    %325 = vmatprep.subr.mxu0 0.0
    %326 = vmatpush1.msra.mxu0 %v299
    %327 = vmatprep.subr.mxu0 0.0
    %328 = vmatpush1.msra.mxu0 %v298
    %329 = vmatprep.subr.mxu0 0.0
    %330 = vmatpush1.msra.mxu0 %v297
    %331 = vmatprep.subr.mxu0 0.0
    %332 = vmatpush1.msra.mxu0 %v296
    %333 = vmatprep.subr.mxu0 0.0
    %334 = vmatpush1.msra.mxu0 %v295
    %335 = vmatprep.subr.mxu0 0.0
    %336 = vmatpush1.msra.mxu0 %v294
    %337 = vmatprep.subr.mxu0 0.0
    %338 = vmatpush1.msra.mxu0 %v293
    %339 = vmatprep.subr.mxu0 0.0
    %340 = vmatpush1.msra.mxu0 %v292
    %341 = vmatprep.subr.mxu0 0.0
    %342 = vmatpush1.msra.mxu0 %v291
    %343 = vmatprep.subr.mxu0 0.0
    %344 = vmatpush1.msra.mxu0 %v290
    %345 = vmatprep.subr.mxu0 0.0
    %346 = vmatpush2.msra.mxu0 0.0
    %347 = vmatprep.subr.mxu0 0.0
    %348 = vmatpush2.msra.mxu0 0.0
    %349 = vmatprep.subr.mxu0 0.0
    %350 = vmatpush2.msra.mxu0 0.0
    %351 = vmatprep.subr.mxu0 0.0
    %352 = vmatpush2.msra.mxu0 0.0
    %353 = vmatprep.subr.mxu0 0.0
    %354 = vmatpush2.msra.mxu0 0.0
    %355 = vmatprep.subr.mxu0 0.0
    %356 = vmatpush2.msra.mxu0 0.0
    %357 = vmatprep.subr.mxu0 0.0
    %358 = vmatpush2.msra.mxu0 0.0
    %359 = vmatprep.subr.mxu0 0.0
    %360 = vmatpush2.msra.mxu0 0.0
    %361 = vmatprep.subr.mxu0 0.0
    %362 = vmatpush2.msra.mxu0 0.0
    %363 = vmatprep.subr.mxu0 0.0
    %364 = vmatpush2.msra.mxu0 0.0
    %365 = vmatprep.subr.mxu0 0.0
    %366 = vmatpush2.msra.mxu0 0.0
    %367 = vmatprep.subr.mxu0 0.0
    %368 = vmatpush2.msra.mxu0 0.0
    %369 = vmatprep.subr.mxu0 0.0
    %370 = vmatpush2.msra.mxu0 0.0
    %371 = vmatprep.subr.mxu0 0.0
    %372 = vmatpush2.msra.mxu0 0.0
    %373 = vmatprep.subr.mxu0 0.0
    %374 = vmatpush2.msra.mxu0 0.0
    %375 = vmatprep.subr.mxu0 0.0
    %376 = vmatpush2.msra.mxu0 0.0
    %377 = vmatprep.mubr.f32.mxu0 0.0
    %378 = vmatmul.mubr.f32.gmra.mxu0 %v289
    %v379 = vpop.f32.mrf.mxu0
    %v380 = vadd.f32 %v311, %v379
    %v381 = vpop.f32.mrf.mxu0
    %382 = vdwg.mxu0
    %v383 = vmul.f32 %v380, 0.2
    %v384 = vmax.f32 %v380, %v383
    %v385 = vld [vmem:[#allocation10] sm:$0xff]
    %v386 = vld [vmem:[#allocation10 + $0x8] sm:$0xff]
    %v387 = vld [vmem:[#allocation10 + $0x10] sm:$0xff]
    %v388 = vld [vmem:[#allocation10 + $0x18] sm:$0xff]
    %v389 = vld [vmem:[#allocation10 + $0x20] sm:$0xff]
    %v390 = vld [vmem:[#allocation10 + $0x28] sm:$0xff]
    %v391 = vld [vmem:[#allocation10 + $0x30] sm:$0xff]
    %v392 = vld [vmem:[#allocation10 + $0x38] sm:$0xff]
    %v393 = vld [vmem:[#allocation10 + $0x40] sm:$0xff]
    %v394 = vld [vmem:[#allocation10 + $0x48] sm:$0xff]
    %v395 = vld [vmem:[#allocation10 + $0x50] sm:$0xff]
    %v396 = vld [vmem:[#allocation10 + $0x58] sm:$0xff]
    %v397 = vld [vmem:[#allocation10 + $0x60] sm:$0xff]
    %v398 = vld [vmem:[#allocation10 + $0x68] sm:$0xff]
    %v399 = vld [vmem:[#allocation10 + $0x70] sm:$0xff]
    %v400 = vld [vmem:[#allocation10 + $0x78] sm:$0xff]
    %v401 = vld [vmem:[%s8] sm:$0x1]
    %v403 = vlaneseq
    %v404 = vshrl.u32 %v403, 7
    %v405 = vsub.s32 0, %v404
    %v406 = vrot.slane %v401, %v405
    %408 = vmatprep.subr.mxu0 0.0
    %409 = vmatpush1.msra.mxu0 %v400
    %410 = vmatprep.subr.mxu0 0.0
    %411 = vmatpush1.msra.mxu0 %v399
    %412 = vmatprep.subr.mxu0 0.0
    %413 = vmatpush1.msra.mxu0 %v398
    %414 = vmatprep.subr.mxu0 0.0
    %415 = vmatpush1.msra.mxu0 %v397
    %416 = vmatprep.subr.mxu0 0.0
    %417 = vmatpush1.msra.mxu0 %v396
    %418 = vmatprep.subr.mxu0 0.0
    %419 = vmatpush1.msra.mxu0 %v395
    %420 = vmatprep.subr.mxu0 0.0
    %421 = vmatpush1.msra.mxu0 %v394
    %422 = vmatprep.subr.mxu0 0.0
    %423 = vmatpush1.msra.mxu0 %v393
    %424 = vmatprep.subr.mxu0 0.0
    %425 = vmatpush1.msra.mxu0 %v392
    %426 = vmatprep.subr.mxu0 0.0
    %427 = vmatpush1.msra.mxu0 %v391
    %428 = vmatprep.subr.mxu0 0.0
    %429 = vmatpush1.msra.mxu0 %v390
    %430 = vmatprep.subr.mxu0 0.0
    %431 = vmatpush1.msra.mxu0 %v389
    %432 = vmatprep.subr.mxu0 0.0
    %433 = vmatpush1.msra.mxu0 %v388
    %434 = vmatprep.subr.mxu0 0.0
    %435 = vmatpush1.msra.mxu0 %v387
    %436 = vmatprep.subr.mxu0 0.0
    %437 = vmatpush1.msra.mxu0 %v386
    %438 = vmatprep.subr.mxu0 0.0
    %439 = vmatpush1.msra.mxu0 %v385
    %440 = vmatprep.subr.mxu0 0.0
    %441 = vmatpush2.msra.mxu0 0.0
    %442 = vmatprep.subr.mxu0 0.0
    %443 = vmatpush2.msra.mxu0 0.0
    %444 = vmatprep.subr.mxu0 0.0
    %445 = vmatpush2.msra.mxu0 0.0
    %446 = vmatprep.subr.mxu0 0.0
    %447 = vmatpush2.msra.mxu0 0.0
    %448 = vmatprep.subr.mxu0 0.0
    %449 = vmatpush2.msra.mxu0 0.0
    %450 = vmatprep.subr.mxu0 0.0
    %451 = vmatpush2.msra.mxu0 0.0
    %452 = vmatprep.subr.mxu0 0.0
    %453 = vmatpush2.msra.mxu0 0.0
    %454 = vmatprep.subr.mxu0 0.0
    %455 = vmatpush2.msra.mxu0 0.0
    %456 = vmatprep.subr.mxu0 0.0
    %457 = vmatpush2.msra.mxu0 0.0
    %458 = vmatprep.subr.mxu0 0.0
    %459 = vmatpush2.msra.mxu0 0.0
    %460 = vmatprep.subr.mxu0 0.0
    %461 = vmatpush2.msra.mxu0 0.0
    %462 = vmatprep.subr.mxu0 0.0
    %463 = vmatpush2.msra.mxu0 0.0
    %464 = vmatprep.subr.mxu0 0.0
    %465 = vmatpush2.msra.mxu0 0.0
    %466 = vmatprep.subr.mxu0 0.0
    %467 = vmatpush2.msra.mxu0 0.0
    %468 = vmatprep.subr.mxu0 0.0
    %469 = vmatpush2.msra.mxu0 0.0
    %470 = vmatprep.subr.mxu0 0.0
    %471 = vmatpush2.msra.mxu0 0.0
    %472 = vmatprep.mubr.f32.mxu0 0.0
    %473 = vmatmul.mubr.f32.gmra.mxu0 %v384
    %v474 = vpop.f32.mrf.mxu0
    %v475 = vadd.f32 %v406, %v474
    %v476 = vpop.f32.mrf.mxu0
    %477 = vdwg.mxu0
    %478 = vst [vmem:[#allocation11] sm:$0xff] %v475
    // Predicated region
    $region58: #{tpu_custom_call.1} parent=1 // pred_check
      _
    $region59: #{tpu_custom_call.1} parent=1 // pred_check_branch
      %480 = sbr.rel (0) target = $region61
    $region60: #{tpu_custom_call.1} parent=1 // pred_region
      %s482 = ssub.s32 128, 128
      %483 = vsyncadd [#allocation4], %s482
      %s485 = sshll.u32 [#allocation11], 4
      %s486 = int_to_ptr.vmem [resolvable:$true] %s485
      %488 = dma.vmem_to_hbm [thread:$0]  %s486, 128, %s9, [#allocation4]
    $region61: #{tpu_custom_call.1} parent=1 // pred_fallthru
      _
    // Predicated region
    $region62: #{tpu_custom_call.1} parent=1 // pred_check
      _
    $region63: #{tpu_custom_call.1} parent=1 // pred_check_branch
      %490 = sbr.rel (0) target = $region65
    $region64: #{tpu_custom_call.1} parent=1 // pred_region
      %491 = dma.done [#allocation4], 128
    $region65: #{tpu_custom_call.1} parent=1 // pred_fallthru
      _
    %492 = vsyncpa [#allocation3], 1
    %493 = vsyncpa [#allocation6], 1
    %494 = vsyncpa [#allocation9], 1
    %495 = vsyncpa [#allocation4], 1

</llo_original>
